<compile_context>
chip_gen: v5e
topology: v5e:2x2
jax: 0.10.0
libtpu: 0.0.40
codegen_flags: <defaults>
</compile_context>

<pallas_src>
import functools

import jax
import jax.numpy as jnp
from jax.experimental import pallas as pl
from jax.experimental.pallas import tpu as pltpu


def mlp_kernel(x_ref, w01_ref, b01_ref, w23_ref, b23_ref, o_ref, *, act_dtype):
    # x: (bm, n_in) f32; W01: (n_in, 256) bf16; W23: (256, n_out) bf16.
    # In-kernel f32->bf16 cast of x (VPU; the kernel has huge VALU slack).
    x = x_ref[...].astype(w01_ref.dtype)

    h = jnp.dot(x, w01_ref[...], preferred_element_type=jnp.float32)
    h = h + b01_ref[...]                              # f32 bias add

    if act_dtype == jnp.float32:
        # v5e path: no bf16 VPU/EUP -> keep sigmoid in f32, cast after.
        h = jax.nn.sigmoid(h).astype(w23_ref.dtype)
    else:
        # v6e/v7x path: cast once, sigmoid on the bf16 EUP, feeds MXU directly.
        h = jax.nn.sigmoid(h.astype(act_dtype)).astype(w23_ref.dtype)

    h = jnp.dot(h, w23_ref[...], preferred_element_type=jnp.float32)
    h = h + b23_ref[...]                              # f32 bias add

    o_ref[...] = h.astype(o_ref.dtype)                # unpadded (bm, n_out) store


def fold_params(params, *, mxu_dtype=jnp.bfloat16):
    """One-time algebraic folding of the two linear-linear pairs (done in f32)
    and bf16 cast of the MXU operands.  No output padding (unpadded store)."""
    w01 = params["w0"] @ params["w1"]                       # (n_in, 256)
    b01 = params["b0"] @ params["w1"] + params["b1"]        # (1, 256)
    w23 = params["w2"] @ params["w3"]                       # (256, n_out)
    b23 = params["b2"] @ params["w3"] + params["b3"]        # (1, n_out)

    folded = {
        "w01": w01.astype(mxu_dtype),
        "b01": b01.astype(jnp.float32),
        "w23": w23.astype(mxu_dtype),
        "b23": b23.astype(jnp.float32),
    }
    return folded, w23.shape[1]


def _pick_bm(B, bm):
    """Batch tile: multiple of 8, collapse to one grid step when B fits."""
    bm = max(8, (bm // 8) * 8)
    bm = min(bm, ((B + 7) // 8) * 8)
    return bm


def _use_bf16_activation():
    """bf16 sigmoid only on generations with a bf16 EUP (v6e / v7x)."""
    try:
        kind = jax.devices()[0].device_kind.lower()
    except Exception:  # pragma: no cover - defensive; fall back to safe f32
        return False
    return ("v6" in kind) or ("v7" in kind)


def net_forward(x, folded, *, n_out, bm=2048):
    """x: (B, n_in) float32.  folded: dict from fold_params().  Returns (B, n_out) f32."""
    B, n_in = x.shape
    w01, b01, w23, b23 = folded["w01"], folded["b01"], folded["w23"], folded["b23"]
    hidden = w01.shape[1]          # 256
    assert w23.shape[1] == n_out

    bm = _pick_bm(B, bm)
    grid = (pl.cdiv(B, bm),)       # B=256 demo: bm=256 -> grid=(1,)

    act_dtype = jnp.bfloat16 if _use_bf16_activation() else jnp.float32
    kernel = functools.partial(mlp_kernel, act_dtype=act_dtype)

    # Advisory cost for the XLA scheduler (matches the real, unpadded footprint).
    flops = 2 * B * (n_in * hidden + hidden * n_out)
    bytes_accessed = (x.size * x.dtype.itemsize
                      + w01.size * w01.dtype.itemsize
                      + w23.size * w23.dtype.itemsize
                      + b01.size * 4 + b23.size * 4
                      + B * n_out * 4)
    cost = pl.CostEstimate(flops=flops, transcendentals=B * hidden,
                           bytes_accessed=bytes_accessed)

    # Weights/biases are small (folded, <100 KiB) and fully VMEM-resident;
    # constant block index means Pallas never re-DMAs them across grid steps.
    full = lambda a: pl.BlockSpec(a.shape, lambda i: (0, 0))

    out = pl.pallas_call(
        kernel,
        out_shape=jax.ShapeDtypeStruct((B, n_out), jnp.float32),
        grid=grid,
        in_specs=[
            pl.BlockSpec((bm, n_in), lambda i: (i, 0)),   # x tile, f32 (cast in-kernel)
            full(w01), full(b01), full(w23), full(b23),
        ],
        out_specs=pl.BlockSpec((bm, n_out), lambda i: (i, 0)),  # unpadded store
        compiler_params=pltpu.CompilerParams(
            dimension_semantics=("parallel",)),
        cost_estimate=cost,
    )(x, w01, b01, w23, b23)

    return out


def init_params(key, n_in, n_out):
    """Deterministic synthetic init (PyTorch-Linear-like uniform fan-in scaling).
    Weights stored transposed vs. PyTorch, i.e. (in_features, out_features)."""
    dims = [(n_in, 512), (512, 256), (256, 128), (128, n_out)]
    params = {}
    for idx, (din, dout) in enumerate(dims):
        key, kw, kb = jax.random.split(key, 3)
        bound = 1.0 / jnp.sqrt(din)
        params[f"w{idx}"] = jax.random.uniform(
            kw, (din, dout), jnp.float32, -bound, bound)
        params[f"b{idx}"] = jax.random.uniform(
            kb, (1, dout), jnp.float32, -bound, bound)
    return params


def reference_forward(x, params):
    """Original 4-layer f32 forward (matches the PyTorch module)."""
    h = x @ params["w0"] + params["b0"]
    h = h @ params["w1"] + params["b1"]
    h = jax.nn.sigmoid(h)
    h = h @ params["w2"] + params["b2"]
    return h @ params["w3"] + params["b3"]


if __name__ == "__main__":
    B, n_in, n_out = 256, 32, 8
    key = jax.random.PRNGKey(0)
    kx, kp = jax.random.split(key)

    x = jax.random.normal(kx, (B, n_in), jnp.float32)
    params = init_params(kp, n_in, n_out)

    # One-time folding / bf16 cast outside the per-call path.
    folded, n_out_real = fold_params(params)

    fwd = jax.jit(functools.partial(net_forward, n_out=n_out_real, bm=2048))
    out = jax.block_until_ready(fwd(x, folded))

    ref = reference_forward(x, params)
    assert out.shape == (B, n_out)
    # bf16 MXU path + exact algebraic folding: loosened tolerance vs pure f32.
    assert jnp.allclose(out, ref, atol=5e-2, rtol=5e-2), (
        float(jnp.max(jnp.abs(out - ref))))

    print("KERNEL_OK")
</pallas_src>

<mosaic_0001>
module attributes {stable_mosaic.version = 11 : i64} {
  func.func @mlp_kernel(%arg0: i32, %arg1: memref<256x32xf32, #tpu.memory_space<vmem>>, %arg2: memref<32x256xbf16, #tpu.memory_space<vmem>>, %arg3: memref<1x256xf32, #tpu.memory_space<vmem>>, %arg4: memref<256x8xbf16, #tpu.memory_space<vmem>>, %arg5: memref<1x8xf32, #tpu.memory_space<vmem>>, %arg6: memref<256x8xf32, #tpu.memory_space<vmem>>) attributes {dimension_semantics = [#tpu.dimension_semantics<parallel>], iteration_bounds = array<i64: 1>, scalar_prefetch = 0 : i64, scratch_operands = 0 : i64, tpu.core_type = #tpu.core_type<tc>, window_params = [{transform_indices = @transform_0, window_bounds = array<i64: 256, 32>}, {pipeline_mode = #tpu.pipeline_mode<synchronous>, transform_indices = @transform_1, window_bounds = array<i64: 32, 256>}, {pipeline_mode = #tpu.pipeline_mode<synchronous>, transform_indices = @transform_2, window_bounds = array<i64: 1, 256>}, {pipeline_mode = #tpu.pipeline_mode<synchronous>, transform_indices = @transform_3, window_bounds = array<i64: 256, 8>}, {pipeline_mode = #tpu.pipeline_mode<synchronous>, transform_indices = @transform_4, window_bounds = array<i64: 1, 8>}, {transform_indices = @transform_5, window_bounds = array<i64: 256, 8>}]} {
    %c0 = arith.constant 0 : index
    %c0_0 = arith.constant 0 : index
    %0 = vector.load %arg1[%c0, %c0_0] : memref<256x32xf32, #tpu.memory_space<vmem>>, vector<256x32xf32>
    %1 = arith.truncf %0 : vector<256x32xf32> to vector<256x32xbf16>
    %c0_1 = arith.constant 0 : index
    %c0_2 = arith.constant 0 : index
    %2 = vector.load %arg2[%c0_1, %c0_2] : memref<32x256xbf16, #tpu.memory_space<vmem>>, vector<32x256xbf16>
    %cst = arith.constant dense<0.000000e+00> : vector<256x256xf32>
    %3 = tpu.matmul %1, %2, %cst {dimension_numbers = #tpu.dot_dimension_numbers<[1], [0], [0], [1], [0, 0, 1, 1], [], []>} : vector<256x32xbf16>, vector<32x256xbf16>, vector<256x256xf32> -> vector<256x256xf32>
    %c0_3 = arith.constant 0 : index
    %c0_4 = arith.constant 0 : index
    %4 = vector.load %arg3[%c0_3, %c0_4] : memref<1x256xf32, #tpu.memory_space<vmem>>, vector<1x256xf32>
    %5 = vector.broadcast %4 : vector<1x256xf32> to vector<256x256xf32>
    %6 = arith.addf %3, %5 : vector<256x256xf32>
    %7 = arith.negf %6 : vector<256x256xf32>
    %8 = math.exp %7 : vector<256x256xf32>
    %cst_5 = arith.constant 1.000000e+00 : f32
    %9 = vector.broadcast %cst_5 : f32 to vector<256x256xf32>
    %10 = arith.addf %9, %8 : vector<256x256xf32>
    %11 = arith.divf %9, %10 : vector<256x256xf32>
    %12 = arith.truncf %11 : vector<256x256xf32> to vector<256x256xbf16>
    %c0_6 = arith.constant 0 : index
    %c0_7 = arith.constant 0 : index
    %13 = vector.load %arg4[%c0_6, %c0_7] : memref<256x8xbf16, #tpu.memory_space<vmem>>, vector<256x8xbf16>
    %cst_8 = arith.constant dense<0.000000e+00> : vector<256x8xf32>
    %14 = tpu.matmul %12, %13, %cst_8 {dimension_numbers = #tpu.dot_dimension_numbers<[1], [0], [0], [1], [0, 0, 1, 1], [], []>} : vector<256x256xbf16>, vector<256x8xbf16>, vector<256x8xf32> -> vector<256x8xf32>
    %c0_9 = arith.constant 0 : index
    %c0_10 = arith.constant 0 : index
    %15 = vector.load %arg5[%c0_9, %c0_10] : memref<1x8xf32, #tpu.memory_space<vmem>>, vector<1x8xf32>
    %16 = vector.broadcast %15 : vector<1x8xf32> to vector<256x8xf32>
    %17 = arith.addf %14, %16 : vector<256x8xf32>
    %c0_11 = arith.constant 0 : index
    %c0_12 = arith.constant 0 : index
    %18 = vector.load %arg6[%c0_11, %c0_12] : memref<256x8xf32, #tpu.memory_space<vmem>>, vector<256x8xf32>
    tpu.vector_store %arg6[%c0_11, %c0_12], %17 {strides = array<i32>} : memref<256x8xf32, #tpu.memory_space<vmem>>, vector<256x8xf32>,
    return
  }
  func.func @transform_0(%arg0: i32) -> (i32, i32) {
    %c0_i32 = arith.constant 0 : i32
    %c0_i32_0 = arith.constant 0 : i32
    return %arg0, %c0_i32 : i32, i32
  }
  func.func @transform_1(%arg0: i32) -> (i32, i32) {
    %c0_i32 = arith.constant 0 : i32
    %c0_i32_0 = arith.constant 0 : i32
    %c0_i32_1 = arith.constant 0 : i32
    return %c0_i32, %c0_i32_0 : i32, i32
  }
  func.func @transform_2(%arg0: i32) -> (i32, i32) {
    %c0_i32 = arith.constant 0 : i32
    %c0_i32_0 = arith.constant 0 : i32
    %c0_i32_1 = arith.constant 0 : i32
    return %c0_i32, %c0_i32_0 : i32, i32
  }
  func.func @transform_3(%arg0: i32) -> (i32, i32) {
    %c0_i32 = arith.constant 0 : i32
    %c0_i32_0 = arith.constant 0 : i32
    %c0_i32_1 = arith.constant 0 : i32
    return %c0_i32, %c0_i32_0 : i32, i32
  }
  func.func @transform_4(%arg0: i32) -> (i32, i32) {
    %c0_i32 = arith.constant 0 : i32
    %c0_i32_0 = arith.constant 0 : i32
    %c0_i32_1 = arith.constant 0 : i32
    return %c0_i32, %c0_i32_0 : i32, i32
  }
  func.func @transform_5(%arg0: i32) -> (i32, i32) {
    %c0_i32 = arith.constant 0 : i32
    %c0_i32_0 = arith.constant 0 : i32
    return %arg0, %c0_i32 : i32, i32
  }
}

</mosaic_0001>

<llo_original>
// kernel: net_forward.1
$region0: #{net_forward.1}
  #allocation0 [shape = 'u32[]', space=smem, size = 0x4, offset = 0x4, fixed_abs, tag = 'smem constant byte address 0x4 - core index']
  #allocation1 [shape = 'u32[72,128]{1,0:T(1,128)}', space=vmem, size = 0x9000, scoped, tag = 'internal scratch']
  %s0 = inlined_call_operand.vmem [shape: f32[256,32], index: 0, kind: input, shape index: {}]
  %s1 = inlined_call_operand.vmem [shape: bf16[32,256], index: 1, kind: input, shape index: {}]
  %s2 = inlined_call_operand.vmem [shape: f32[1,256], index: 2, kind: input, shape index: {}]
  %s3 = inlined_call_operand.vmem [shape: bf16[256,8], index: 3, kind: input, shape index: {}]
  %s4 = inlined_call_operand.vmem [shape: f32[1,8], index: 4, kind: input, shape index: {}]
  %s5 = inlined_call_operand.vmem [shape: f32[256,8], index: 5, kind: output, shape index: {}]
  %s6 = sld [smem:[#allocation0]]
  $region30: #{net_forward.1} parent=0
    _
  %s8 = ssub.s32 1, %s6
  %s9 = scalar_select 0, %s8, %s6
  // Predicated region
  $region2: #{net_forward.1} parent=0 // pred_check
    _
  $region3: #{net_forward.1} parent=0 // pred_check_branch
    %11 = sbr.rel (0) target = $region5
  $region4: #{net_forward.1} parent=0 // pred_region
    _
  $region5: #{net_forward.1} parent=0 // pred_fallthru
    _
  // Predicated region
  $region6: #{net_forward.1} parent=0 // pred_check
    _
  $region7: #{net_forward.1} parent=0 // pred_check_branch
    %13 = sbr.rel (0) target = $region9
  $region8: #{net_forward.1} parent=0 // pred_region
    _
  $region9: #{net_forward.1} parent=0 // pred_fallthru
    _
  // Predicated region
  $region10: #{net_forward.1} parent=0 // pred_check
    _
  $region11: #{net_forward.1} parent=0 // pred_check_branch
    %15 = sbr.rel (0) target = $region13
  $region12: #{net_forward.1} parent=0 // pred_region
    _
  $region13: #{net_forward.1} parent=0 // pred_fallthru
    _
  // Predicated region
  $region14: #{net_forward.1} parent=0 // pred_check
    _
  $region15: #{net_forward.1} parent=0 // pred_check_branch
    %17 = sbr.rel (0) target = $region17
  $region16: #{net_forward.1} parent=0 // pred_region
    _
  $region17: #{net_forward.1} parent=0 // pred_fallthru
    _
  // Predicated region
  $region18: #{net_forward.1} parent=0 // pred_check
    _
  $region19: #{net_forward.1} parent=0 // pred_check_branch
    %19 = sbr.rel (0) target = $region21
  $region20: #{net_forward.1} parent=0 // pred_region
    _
  $region21: #{net_forward.1} parent=0 // pred_fallthru
    _
  %v21 = vld [vmem:[%s0] sm:$0xff]
  %v22 = vld [vmem:[%s0 + $0x8] sm:$0xff]
  %v23 = vld [vmem:[%s0 + $0x10] sm:$0xff]
  %v24 = vld [vmem:[%s0 + $0x18] sm:$0xff]
  %v25 = vld [vmem:[%s0 + $0x20] sm:$0xff]
  %v26 = vld [vmem:[%s0 + $0x28] sm:$0xff]
  %v27 = vld [vmem:[%s0 + $0x30] sm:$0xff]
  %v28 = vld [vmem:[%s0 + $0x38] sm:$0xff]
  %v29 = vld [vmem:[%s0 + $0x40] sm:$0xff]
  %v30 = vld [vmem:[%s0 + $0x48] sm:$0xff]
  %v31 = vld [vmem:[%s0 + $0x50] sm:$0xff]
  %v32 = vld [vmem:[%s0 + $0x58] sm:$0xff]
  %v33 = vld [vmem:[%s0 + $0x60] sm:$0xff]
  %v34 = vld [vmem:[%s0 + $0x68] sm:$0xff]
  %v35 = vld [vmem:[%s0 + $0x70] sm:$0xff]
  %v36 = vld [vmem:[%s0 + $0x78] sm:$0xff]
  %v37 = vld [vmem:[%s0 + $0x80] sm:$0xff]
  %v38 = vld [vmem:[%s0 + $0x88] sm:$0xff]
  %v39 = vld [vmem:[%s0 + $0x90] sm:$0xff]
  %v40 = vld [vmem:[%s0 + $0x98] sm:$0xff]
  %v41 = vld [vmem:[%s0 + $0xa0] sm:$0xff]
  %v42 = vld [vmem:[%s0 + $0xa8] sm:$0xff]
  %v43 = vld [vmem:[%s0 + $0xb0] sm:$0xff]
  %v44 = vld [vmem:[%s0 + $0xb8] sm:$0xff]
  %v45 = vld [vmem:[%s0 + $0xc0] sm:$0xff]
  %v46 = vld [vmem:[%s0 + $0xc8] sm:$0xff]
  %v47 = vld [vmem:[%s0 + $0xd0] sm:$0xff]
  %v48 = vld [vmem:[%s0 + $0xd8] sm:$0xff]
  %v49 = vld [vmem:[%s0 + $0xe0] sm:$0xff]
  %v50 = vld [vmem:[%s0 + $0xe8] sm:$0xff]
  %v51 = vld [vmem:[%s0 + $0xf0] sm:$0xff]
  %v52 = vld [vmem:[%s0 + $0xf8] sm:$0xff]
  %v53 = vpack.c.bf16 %v22, %v21
  %v54 = vpack.c.bf16 %v24, %v23
  %v55 = vpack.c.bf16 %v26, %v25
  %v56 = vpack.c.bf16 %v28, %v27
  %v57 = vpack.c.bf16 %v30, %v29
  %v58 = vpack.c.bf16 %v32, %v31
  %v59 = vpack.c.bf16 %v34, %v33
  %v60 = vpack.c.bf16 %v36, %v35
  %v61 = vpack.c.bf16 %v38, %v37
  %v62 = vpack.c.bf16 %v40, %v39
  %v63 = vpack.c.bf16 %v42, %v41
  %v64 = vpack.c.bf16 %v44, %v43
  %v65 = vpack.c.bf16 %v46, %v45
  %v66 = vpack.c.bf16 %v48, %v47
  %v67 = vpack.c.bf16 %v50, %v49
  %v68 = vpack.c.bf16 %v52, %v51
  %v69 = vld [vmem:[%s1] sm:$0xff]
  %v70 = vld [vmem:[%s1 + $0x8] sm:$0xff]
  %v71 = vld [vmem:[%s1 + $0x10] sm:$0xff]
  %v72 = vld [vmem:[%s1 + $0x18] sm:$0xff]
  %v73 = vld [vmem:[%s2] sm:$0x3]
  %v75 = vperm.slane %v73, 0
  %v76 = vperm.slane %v73, 1
  %v83 = vunpack.c.l.b16 %v69
  %v84 = vunpack.c.h.b16 %v69
  %v85 = vunpack.c.l.b16 %v70
  %v86 = vunpack.c.h.b16 %v70
  %v87 = vunpack.c.l.b16 %v71
  %v88 = vunpack.c.h.b16 %v71
  %v89 = vunpack.c.l.b16 %v72
  %v90 = vunpack.c.h.b16 %v72
  %v91 = vpack.c.b16 %v85, %v83
  %v92 = vpack.c.b16 %v86, %v84
  %v93 = vpack.c.b16 %v89, %v87
  %v94 = vpack.c.b16 %v90, %v88
  %vm99 = vcmask 261120
  %v101 = vsel %vm99, %v53, 0
  %v104 = vsel %vm99, %v54, 0
  %v107 = vsel %vm99, %v55, 0
  %v110 = vsel %vm99, %v56, 0
  %v113 = vsel %vm99, %v57, 0
  %v116 = vsel %vm99, %v58, 0
  %v119 = vsel %vm99, %v59, 0
  %v122 = vsel %vm99, %v60, 0
  %v125 = vsel %vm99, %v61, 0
  %v128 = vsel %vm99, %v62, 0
  %v131 = vsel %vm99, %v63, 0
  %v134 = vsel %vm99, %v64, 0
  %v137 = vsel %vm99, %v65, 0
  %v140 = vsel %vm99, %v66, 0
  %v143 = vsel %vm99, %v67, 0
  %v146 = vsel %vm99, %v68, 0
  %148 = vmatpush.bf16.msra.mxu0 0
  %149 = vmatpush.bf16.msra.mxu0 0
  %150 = vmatpush.bf16.msra.mxu0 0
  %151 = vmatpush.bf16.msra.mxu0 0
  %152 = vmatpush.bf16.msra.mxu0 0
  %153 = vmatpush.bf16.msra.mxu0 0
  %154 = vmatpush.bf16.msra.mxu0 %v93
  %155 = vmatpush.bf16.msra.mxu0 %v91
  %156 = vmatmul.bf16.gmra.mxu0 %v101
  %v157 = vpop.f32.mrf.mxu0
  %v158 = vadd.f32 %v75, %v157
  %v159 = vpop.f32.mrf.mxu0
  %v160 = vadd.f32 %v75, %v159
  %161 = vmatmul.bf16.gmra.mxu0 %v104
  %v162 = vpop.f32.mrf.mxu0
  %v163 = vadd.f32 %v75, %v162
  %v164 = vpop.f32.mrf.mxu0
  %v165 = vadd.f32 %v75, %v164
  %166 = vmatmul.bf16.gmra.mxu0 %v107
  %v167 = vpop.f32.mrf.mxu0
  %v168 = vadd.f32 %v75, %v167
  %v169 = vpop.f32.mrf.mxu0
  %v170 = vadd.f32 %v75, %v169
  %171 = vmatmul.bf16.gmra.mxu0 %v110
  %v172 = vpop.f32.mrf.mxu0
  %v173 = vadd.f32 %v75, %v172
  %v174 = vpop.f32.mrf.mxu0
  %v175 = vadd.f32 %v75, %v174
  %176 = vmatmul.bf16.gmra.mxu0 %v113
  %v177 = vpop.f32.mrf.mxu0
  %v178 = vadd.f32 %v75, %v177
  %v179 = vpop.f32.mrf.mxu0
  %v180 = vadd.f32 %v75, %v179
  %181 = vmatmul.bf16.gmra.mxu0 %v116
  %v182 = vpop.f32.mrf.mxu0
  %v183 = vadd.f32 %v75, %v182
  %v184 = vpop.f32.mrf.mxu0
  %v185 = vadd.f32 %v75, %v184
  %186 = vmatmul.bf16.gmra.mxu0 %v119
  %v187 = vpop.f32.mrf.mxu0
  %v188 = vadd.f32 %v75, %v187
  %v189 = vpop.f32.mrf.mxu0
  %v190 = vadd.f32 %v75, %v189
  %191 = vmatmul.bf16.gmra.mxu0 %v122
  %v192 = vpop.f32.mrf.mxu0
  %v193 = vadd.f32 %v75, %v192
  %v194 = vpop.f32.mrf.mxu0
  %v195 = vadd.f32 %v75, %v194
  %196 = vmatmul.bf16.gmra.mxu0 %v125
  %v197 = vpop.f32.mrf.mxu0
  %v198 = vadd.f32 %v75, %v197
  %v199 = vpop.f32.mrf.mxu0
  %v200 = vadd.f32 %v75, %v199
  %201 = vmatmul.bf16.gmra.mxu0 %v128
  %v202 = vpop.f32.mrf.mxu0
  %v203 = vadd.f32 %v75, %v202
  %v204 = vpop.f32.mrf.mxu0
  %v205 = vadd.f32 %v75, %v204
  %206 = vmatmul.bf16.gmra.mxu0 %v131
  %v207 = vpop.f32.mrf.mxu0
  %v208 = vadd.f32 %v75, %v207
  %v209 = vpop.f32.mrf.mxu0
  %v210 = vadd.f32 %v75, %v209
  %211 = vmatmul.bf16.gmra.mxu0 %v134
  %v212 = vpop.f32.mrf.mxu0
  %v213 = vadd.f32 %v75, %v212
  %v214 = vpop.f32.mrf.mxu0
  %v215 = vadd.f32 %v75, %v214
  %216 = vmatmul.bf16.gmra.mxu0 %v137
  %v217 = vpop.f32.mrf.mxu0
  %v218 = vadd.f32 %v75, %v217
  %v219 = vpop.f32.mrf.mxu0
  %v220 = vadd.f32 %v75, %v219
  %221 = vmatmul.bf16.gmra.mxu0 %v140
  %v222 = vpop.f32.mrf.mxu0
  %v223 = vadd.f32 %v75, %v222
  %v224 = vpop.f32.mrf.mxu0
  %v225 = vadd.f32 %v75, %v224
  %226 = vmatmul.bf16.gmra.mxu0 %v143
  %v227 = vpop.f32.mrf.mxu0
  %v228 = vadd.f32 %v75, %v227
  %v229 = vpop.f32.mrf.mxu0
  %v230 = vadd.f32 %v75, %v229
  %231 = vmatmul.bf16.gmra.mxu0 %v146
  %v232 = vpop.f32.mrf.mxu0
  %v233 = vadd.f32 %v75, %v232
  %v234 = vpop.f32.mrf.mxu0
  %v235 = vadd.f32 %v75, %v234
  %236 = vdwg.mxu0
  %237 = vmatpush.bf16.msra.mxu0 0
  %238 = vmatpush.bf16.msra.mxu0 0
  %239 = vmatpush.bf16.msra.mxu0 0
  %240 = vmatpush.bf16.msra.mxu0 0
  %241 = vmatpush.bf16.msra.mxu0 0
  %242 = vmatpush.bf16.msra.mxu0 0
  %243 = vmatpush.bf16.msra.mxu0 %v94
  %244 = vmatpush.bf16.msra.mxu0 %v92
  %245 = vmatmul.bf16.gmra.mxu0 %v101
  %v246 = vpop.f32.mrf.mxu0
  %v247 = vadd.f32 %v76, %v246
  %v248 = vpop.f32.mrf.mxu0
  %v249 = vadd.f32 %v76, %v248
  %250 = vmatmul.bf16.gmra.mxu0 %v104
  %v251 = vpop.f32.mrf.mxu0
  %v252 = vadd.f32 %v76, %v251
  %v253 = vpop.f32.mrf.mxu0
  %v254 = vadd.f32 %v76, %v253
  %255 = vmatmul.bf16.gmra.mxu0 %v107
  %v256 = vpop.f32.mrf.mxu0
  %v257 = vadd.f32 %v76, %v256
  %v258 = vpop.f32.mrf.mxu0
  %v259 = vadd.f32 %v76, %v258
  %260 = vmatmul.bf16.gmra.mxu0 %v110
  %v261 = vpop.f32.mrf.mxu0
  %v262 = vadd.f32 %v76, %v261
  %v263 = vpop.f32.mrf.mxu0
  %v264 = vadd.f32 %v76, %v263
  %265 = vmatmul.bf16.gmra.mxu0 %v113
  %v266 = vpop.f32.mrf.mxu0
  %v267 = vadd.f32 %v76, %v266
  %v268 = vpop.f32.mrf.mxu0
  %v269 = vadd.f32 %v76, %v268
  %270 = vmatmul.bf16.gmra.mxu0 %v116
  %v271 = vpop.f32.mrf.mxu0
  %v272 = vadd.f32 %v76, %v271
  %v273 = vpop.f32.mrf.mxu0
  %v274 = vadd.f32 %v76, %v273
  %275 = vmatmul.bf16.gmra.mxu0 %v119
  %v276 = vpop.f32.mrf.mxu0
  %v277 = vadd.f32 %v76, %v276
  %v278 = vpop.f32.mrf.mxu0
  %v279 = vadd.f32 %v76, %v278
  %280 = vmatmul.bf16.gmra.mxu0 %v122
  %v281 = vpop.f32.mrf.mxu0
  %v282 = vadd.f32 %v76, %v281
  %v283 = vpop.f32.mrf.mxu0
  %v284 = vadd.f32 %v76, %v283
  %285 = vmatmul.bf16.gmra.mxu0 %v125
  %v286 = vpop.f32.mrf.mxu0
  %v287 = vadd.f32 %v76, %v286
  %v288 = vpop.f32.mrf.mxu0
  %v289 = vadd.f32 %v76, %v288
  %290 = vmatmul.bf16.gmra.mxu0 %v128
  %v291 = vpop.f32.mrf.mxu0
  %v292 = vadd.f32 %v76, %v291
  %v293 = vpop.f32.mrf.mxu0
  %v294 = vadd.f32 %v76, %v293
  %295 = vmatmul.bf16.gmra.mxu0 %v131
  %v296 = vpop.f32.mrf.mxu0
  %v297 = vadd.f32 %v76, %v296
  %v298 = vpop.f32.mrf.mxu0
  %v299 = vadd.f32 %v76, %v298
  %300 = vmatmul.bf16.gmra.mxu0 %v134
  %v301 = vpop.f32.mrf.mxu0
  %v302 = vadd.f32 %v76, %v301
  %v303 = vpop.f32.mrf.mxu0
  %v304 = vadd.f32 %v76, %v303
  %305 = vmatmul.bf16.gmra.mxu0 %v137
  %v306 = vpop.f32.mrf.mxu0
  %v307 = vadd.f32 %v76, %v306
  %v308 = vpop.f32.mrf.mxu0
  %v309 = vadd.f32 %v76, %v308
  %310 = vmatmul.bf16.gmra.mxu0 %v140
  %v311 = vpop.f32.mrf.mxu0
  %v312 = vadd.f32 %v76, %v311
  %v313 = vpop.f32.mrf.mxu0
  %v314 = vadd.f32 %v76, %v313
  %315 = vmatmul.bf16.gmra.mxu0 %v143
  %v316 = vpop.f32.mrf.mxu0
  %v317 = vadd.f32 %v76, %v316
  %v318 = vpop.f32.mrf.mxu0
  %v319 = vadd.f32 %v76, %v318
  %320 = vmatmul.bf16.gmra.mxu0 %v146
  %v321 = vpop.f32.mrf.mxu0
  %v322 = vadd.f32 %v76, %v321
  %v323 = vpop.f32.mrf.mxu0
  %v324 = vadd.f32 %v76, %v323
  %325 = vdwg.mxu0
  %v326 = vxor.u32 %v158, 2147483648
  %v327 = vxor.u32 %v247, 2147483648
  %v328 = vxor.u32 %v160, 2147483648
  %v329 = vxor.u32 %v249, 2147483648
  %v330 = vxor.u32 %v163, 2147483648
  %v331 = vxor.u32 %v252, 2147483648
  %v332 = vxor.u32 %v165, 2147483648
  %v333 = vxor.u32 %v254, 2147483648
  %v334 = vxor.u32 %v168, 2147483648
  %v335 = vxor.u32 %v257, 2147483648
  %v336 = vxor.u32 %v170, 2147483648
  %v337 = vxor.u32 %v259, 2147483648
  %v338 = vxor.u32 %v173, 2147483648
  %v339 = vxor.u32 %v262, 2147483648
  %v340 = vxor.u32 %v175, 2147483648
  %v341 = vxor.u32 %v264, 2147483648
  %v342 = vxor.u32 %v178, 2147483648
  %v343 = vxor.u32 %v267, 2147483648
  %v344 = vxor.u32 %v180, 2147483648
  %v345 = vxor.u32 %v269, 2147483648
  %v346 = vxor.u32 %v183, 2147483648
  %v347 = vxor.u32 %v272, 2147483648
  %v348 = vxor.u32 %v185, 2147483648
  %v349 = vxor.u32 %v274, 2147483648
  %v350 = vxor.u32 %v188, 2147483648
  %v351 = vxor.u32 %v277, 2147483648
  %v352 = vxor.u32 %v190, 2147483648
  %v353 = vxor.u32 %v279, 2147483648
  %v354 = vxor.u32 %v193, 2147483648
  %v355 = vxor.u32 %v282, 2147483648
  %v356 = vxor.u32 %v195, 2147483648
  %v357 = vxor.u32 %v284, 2147483648
  %v358 = vxor.u32 %v198, 2147483648
  %v359 = vxor.u32 %v287, 2147483648
  %v360 = vxor.u32 %v200, 2147483648
  %v361 = vxor.u32 %v289, 2147483648
  %v362 = vxor.u32 %v203, 2147483648
  %v363 = vxor.u32 %v292, 2147483648
  %v364 = vxor.u32 %v205, 2147483648
  %v365 = vxor.u32 %v294, 2147483648
  %v366 = vxor.u32 %v208, 2147483648
  %v367 = vxor.u32 %v297, 2147483648
  %v368 = vxor.u32 %v210, 2147483648
  %v369 = vxor.u32 %v299, 2147483648
  %v370 = vxor.u32 %v213, 2147483648
  %v371 = vxor.u32 %v302, 2147483648
  %v372 = vxor.u32 %v215, 2147483648
  %v373 = vxor.u32 %v304, 2147483648
  %v374 = vxor.u32 %v218, 2147483648
  %v375 = vxor.u32 %v307, 2147483648
  %v376 = vxor.u32 %v220, 2147483648
  %v377 = vxor.u32 %v309, 2147483648
  %v378 = vxor.u32 %v223, 2147483648
  %v379 = vxor.u32 %v312, 2147483648
  %v380 = vxor.u32 %v225, 2147483648
  %v381 = vxor.u32 %v314, 2147483648
  %v382 = vxor.u32 %v228, 2147483648
  %v383 = vxor.u32 %v317, 2147483648
  %v384 = vxor.u32 %v230, 2147483648
  %v385 = vxor.u32 %v319, 2147483648
  %v386 = vxor.u32 %v233, 2147483648
  %v387 = vxor.u32 %v322, 2147483648
  %v388 = vxor.u32 %v235, 2147483648
  %v389 = vxor.u32 %v324, 2147483648
  %v390 = vmul.f32 %v326, 1.442695
  %v391 = vpow.pop %v390
  %v392 = vmul.f32 %v327, 1.442695
  %v393 = vpow.pop %v392
  %v394 = vmul.f32 %v328, 1.442695
  %v395 = vpow.pop %v394
  %v396 = vmul.f32 %v329, 1.442695
  %v397 = vpow.pop %v396
  %v398 = vmul.f32 %v330, 1.442695
  %v399 = vpow.pop %v398
  %v400 = vmul.f32 %v331, 1.442695
  %v401 = vpow.pop %v400
  %v402 = vmul.f32 %v332, 1.442695
  %v403 = vpow.pop %v402
  %v404 = vmul.f32 %v333, 1.442695
  %v405 = vpow.pop %v404
  %v406 = vmul.f32 %v334, 1.442695
  %v407 = vpow.pop %v406
  %v408 = vmul.f32 %v335, 1.442695
  %v409 = vpow.pop %v408
  %v410 = vmul.f32 %v336, 1.442695
  %v411 = vpow.pop %v410
  %v412 = vmul.f32 %v337, 1.442695
  %v413 = vpow.pop %v412
  %v414 = vmul.f32 %v338, 1.442695
  %v415 = vpow.pop %v414
  %v416 = vmul.f32 %v339, 1.442695
  %v417 = vpow.pop %v416
  %v418 = vmul.f32 %v340, 1.442695
  %v419 = vpow.pop %v418
  %v420 = vmul.f32 %v341, 1.442695
  %v421 = vpow.pop %v420
  %v422 = vmul.f32 %v342, 1.442695
  %v423 = vpow.pop %v422
  %v424 = vmul.f32 %v343, 1.442695
  %v425 = vpow.pop %v424
  %v426 = vmul.f32 %v344, 1.442695
  %v427 = vpow.pop %v426
  %v428 = vmul.f32 %v345, 1.442695
  %v429 = vpow.pop %v428
  %v430 = vmul.f32 %v346, 1.442695
  %v431 = vpow.pop %v430
  %v432 = vmul.f32 %v347, 1.442695
  %v433 = vpow.pop %v432
  %v434 = vmul.f32 %v348, 1.442695
  %v435 = vpow.pop %v434
  %v436 = vmul.f32 %v349, 1.442695
  %v437 = vpow.pop %v436
  %v438 = vmul.f32 %v350, 1.442695
  %v439 = vpow.pop %v438
  %v440 = vmul.f32 %v351, 1.442695
  %v441 = vpow.pop %v440
  %v442 = vmul.f32 %v352, 1.442695
  %v443 = vpow.pop %v442
  %v444 = vmul.f32 %v353, 1.442695
  %v445 = vpow.pop %v444
  %v446 = vmul.f32 %v354, 1.442695
  %v447 = vpow.pop %v446
  %v448 = vmul.f32 %v355, 1.442695
  %v449 = vpow.pop %v448
  %v450 = vmul.f32 %v356, 1.442695
  %v451 = vpow.pop %v450
  %v452 = vmul.f32 %v357, 1.442695
  %v453 = vpow.pop %v452
  %v454 = vmul.f32 %v358, 1.442695
  %v455 = vpow.pop %v454
  %v456 = vmul.f32 %v359, 1.442695
  %v457 = vpow.pop %v456
  %v458 = vmul.f32 %v360, 1.442695
  %v459 = vpow.pop %v458
  %v460 = vmul.f32 %v361, 1.442695
  %v461 = vpow.pop %v460
  %v462 = vmul.f32 %v362, 1.442695
  %v463 = vpow.pop %v462
  %v464 = vmul.f32 %v363, 1.442695
  %v465 = vpow.pop %v464
  %v466 = vmul.f32 %v364, 1.442695
  %v467 = vpow.pop %v466
  %v468 = vmul.f32 %v365, 1.442695
  %v469 = vpow.pop %v468
  %v470 = vmul.f32 %v366, 1.442695
  %v471 = vpow.pop %v470
  %v472 = vmul.f32 %v367, 1.442695
  %v473 = vpow.pop %v472
  %v474 = vmul.f32 %v368, 1.442695
  %v475 = vpow.pop %v474
  %v476 = vmul.f32 %v369, 1.442695
  %v477 = vpow.pop %v476
  %v478 = vmul.f32 %v370, 1.442695
  %v479 = vpow.pop %v478
  %v480 = vmul.f32 %v371, 1.442695
  %v481 = vpow.pop %v480
  %v482 = vmul.f32 %v372, 1.442695
  %v483 = vpow.pop %v482
  %v484 = vmul.f32 %v373, 1.442695
  %v485 = vpow.pop %v484
  %v486 = vmul.f32 %v374, 1.442695
  %v487 = vpow.pop %v486
  %v488 = vmul.f32 %v375, 1.442695
  %v489 = vpow.pop %v488
  %v490 = vmul.f32 %v376, 1.442695
  %v491 = vpow.pop %v490
  %v492 = vmul.f32 %v377, 1.442695
  %v493 = vpow.pop %v492
  %v494 = vmul.f32 %v378, 1.442695
  %v495 = vpow.pop %v494
  %v496 = vmul.f32 %v379, 1.442695
  %v497 = vpow.pop %v496
  %v498 = vmul.f32 %v380, 1.442695
  %v499 = vpow.pop %v498
  %v500 = vmul.f32 %v381, 1.442695
  %v501 = vpow.pop %v500
  %v502 = vmul.f32 %v382, 1.442695
  %v503 = vpow.pop %v502
  %v504 = vmul.f32 %v383, 1.442695
  %v505 = vpow.pop %v504
  %v506 = vmul.f32 %v384, 1.442695
  %v507 = vpow.pop %v506
  %v508 = vmul.f32 %v385, 1.442695
  %v509 = vpow.pop %v508
  %v510 = vmul.f32 %v386, 1.442695
  %v511 = vpow.pop %v510
  %v512 = vmul.f32 %v387, 1.442695
  %v513 = vpow.pop %v512
  %v514 = vmul.f32 %v388, 1.442695
  %v515 = vpow.pop %v514
  %v516 = vmul.f32 %v389, 1.442695
  %v517 = vpow.pop %v516
  %v518 = vadd.f32 %v391, 1.0
  %v519 = vadd.f32 %v393, 1.0
  %v520 = vadd.f32 %v395, 1.0
  %v521 = vadd.f32 %v397, 1.0
  %v522 = vadd.f32 %v399, 1.0
  %v523 = vadd.f32 %v401, 1.0
  %v524 = vadd.f32 %v403, 1.0
  %v525 = vadd.f32 %v405, 1.0
  %v526 = vadd.f32 %v407, 1.0
  %v527 = vadd.f32 %v409, 1.0
  %v528 = vadd.f32 %v411, 1.0
  %v529 = vadd.f32 %v413, 1.0
  %v530 = vadd.f32 %v415, 1.0
  %v531 = vadd.f32 %v417, 1.0
  %v532 = vadd.f32 %v419, 1.0
  %v533 = vadd.f32 %v421, 1.0
  %v534 = vadd.f32 %v423, 1.0
  %v535 = vadd.f32 %v425, 1.0
  %v536 = vadd.f32 %v427, 1.0
  %v537 = vadd.f32 %v429, 1.0
  %v538 = vadd.f32 %v431, 1.0
  %v539 = vadd.f32 %v433, 1.0
  %v540 = vadd.f32 %v435, 1.0
  %v541 = vadd.f32 %v437, 1.0
  %v542 = vadd.f32 %v439, 1.0
  %v543 = vadd.f32 %v441, 1.0
  %v544 = vadd.f32 %v443, 1.0
  %v545 = vadd.f32 %v445, 1.0
  %v546 = vadd.f32 %v447, 1.0
  %v547 = vadd.f32 %v449, 1.0
  %v548 = vadd.f32 %v451, 1.0
  %v549 = vadd.f32 %v453, 1.0
  %v550 = vadd.f32 %v455, 1.0
  %v551 = vadd.f32 %v457, 1.0
  %v552 = vadd.f32 %v459, 1.0
  %v553 = vadd.f32 %v461, 1.0
  %v554 = vadd.f32 %v463, 1.0
  %v555 = vadd.f32 %v465, 1.0
  %v556 = vadd.f32 %v467, 1.0
  %v557 = vadd.f32 %v469, 1.0
  %v558 = vadd.f32 %v471, 1.0
  %v559 = vadd.f32 %v473, 1.0
  %v560 = vadd.f32 %v475, 1.0
  %v561 = vadd.f32 %v477, 1.0
  %v562 = vadd.f32 %v479, 1.0
  %v563 = vadd.f32 %v481, 1.0
  %v564 = vadd.f32 %v483, 1.0
  %v565 = vadd.f32 %v485, 1.0
  %v566 = vadd.f32 %v487, 1.0
  %v567 = vadd.f32 %v489, 1.0
  %v568 = vadd.f32 %v491, 1.0
  %v569 = vadd.f32 %v493, 1.0
  %v570 = vadd.f32 %v495, 1.0
  %v571 = vadd.f32 %v497, 1.0
  %v572 = vadd.f32 %v499, 1.0
  %v573 = vadd.f32 %v501, 1.0
  %v574 = vadd.f32 %v503, 1.0
  %v575 = vadd.f32 %v505, 1.0
  %v576 = vadd.f32 %v507, 1.0
  %v577 = vadd.f32 %v509, 1.0
  %v578 = vadd.f32 %v511, 1.0
  %v579 = vadd.f32 %v513, 1.0
  %v580 = vadd.f32 %v515, 1.0
  %v581 = vadd.f32 %v517, 1.0
  %v582 = vrcp.pop %v518
  %v583 = vmul.f32 %v518, %v582
  %v584 = vsub.f32 1.0, %v583
  %v585 = vmul.f32 %v582, %v584
  %v586 = vadd.f32 %v582, %v585
  %vm587 = vweird.f32 %v518
  %vm588 = vweird.f32 %v582
  %vm589 = vmor %vm587, %vm588
  %v590 = vsel %vm589, %v582, %v586
  %v591 = vand.u32 2147483647, %v518
  %vm592 = vcmp.eq.f32.partialorder %v591, 8.507059e+37
  %v593 = vand.u32 %v518, 2147483648
  %v594 = vor.u32 1.1754944e-38, %v593
  %v595 = vsel %vm592, %v594, %v590
  %v596 = vmul.f32 1.0, %v595
  %v597 = vrcp.pop %v519
  %v598 = vmul.f32 %v519, %v597
  %v599 = vsub.f32 1.0, %v598
  %v600 = vmul.f32 %v597, %v599
  %v601 = vadd.f32 %v597, %v600
  %vm602 = vweird.f32 %v519
  %vm603 = vweird.f32 %v597
  %vm604 = vmor %vm602, %vm603
  %v605 = vsel %vm604, %v597, %v601
  %v606 = vand.u32 2147483647, %v519
  %vm607 = vcmp.eq.f32.partialorder %v606, 8.507059e+37
  %v608 = vand.u32 %v519, 2147483648
  %v609 = vor.u32 1.1754944e-38, %v608
  %v610 = vsel %vm607, %v609, %v605
  %v611 = vmul.f32 1.0, %v610
  %v612 = vrcp.pop %v520
  %v613 = vmul.f32 %v520, %v612
  %v614 = vsub.f32 1.0, %v613
  %v615 = vmul.f32 %v612, %v614
  %v616 = vadd.f32 %v612, %v615
  %vm617 = vweird.f32 %v520
  %vm618 = vweird.f32 %v612
  %vm619 = vmor %vm617, %vm618
  %v620 = vsel %vm619, %v612, %v616
  %v621 = vand.u32 2147483647, %v520
  %vm622 = vcmp.eq.f32.partialorder %v621, 8.507059e+37
  %v623 = vand.u32 %v520, 2147483648
  %v624 = vor.u32 1.1754944e-38, %v623
  %v625 = vsel %vm622, %v624, %v620
  %v626 = vmul.f32 1.0, %v625
  %v627 = vrcp.pop %v521
  %v628 = vmul.f32 %v521, %v627
  %v629 = vsub.f32 1.0, %v628
  %v630 = vmul.f32 %v627, %v629
  %v631 = vadd.f32 %v627, %v630
  %vm632 = vweird.f32 %v521
  %vm633 = vweird.f32 %v627
  %vm634 = vmor %vm632, %vm633
  %v635 = vsel %vm634, %v627, %v631
  %v636 = vand.u32 2147483647, %v521
  %vm637 = vcmp.eq.f32.partialorder %v636, 8.507059e+37
  %v638 = vand.u32 %v521, 2147483648
  %v639 = vor.u32 1.1754944e-38, %v638
  %v640 = vsel %vm637, %v639, %v635
  %v641 = vmul.f32 1.0, %v640
  %v642 = vrcp.pop %v522
  %v643 = vmul.f32 %v522, %v642
  %v644 = vsub.f32 1.0, %v643
  %v645 = vmul.f32 %v642, %v644
  %v646 = vadd.f32 %v642, %v645
  %vm647 = vweird.f32 %v522
  %vm648 = vweird.f32 %v642
  %vm649 = vmor %vm647, %vm648
  %v650 = vsel %vm649, %v642, %v646
  %v651 = vand.u32 2147483647, %v522
  %vm652 = vcmp.eq.f32.partialorder %v651, 8.507059e+37
  %v653 = vand.u32 %v522, 2147483648
  %v654 = vor.u32 1.1754944e-38, %v653
  %v655 = vsel %vm652, %v654, %v650
  %v656 = vmul.f32 1.0, %v655
  %v657 = vrcp.pop %v523
  %v658 = vmul.f32 %v523, %v657
  %v659 = vsub.f32 1.0, %v658
  %v660 = vmul.f32 %v657, %v659
  %v661 = vadd.f32 %v657, %v660
  %vm662 = vweird.f32 %v523
  %vm663 = vweird.f32 %v657
  %vm664 = vmor %vm662, %vm663
  %v665 = vsel %vm664, %v657, %v661
  %v666 = vand.u32 2147483647, %v523
  %vm667 = vcmp.eq.f32.partialorder %v666, 8.507059e+37
  %v668 = vand.u32 %v523, 2147483648
  %v669 = vor.u32 1.1754944e-38, %v668
  %v670 = vsel %vm667, %v669, %v665
  %v671 = vmul.f32 1.0, %v670
  %v672 = vrcp.pop %v524
  %v673 = vmul.f32 %v524, %v672
  %v674 = vsub.f32 1.0, %v673
  %v675 = vmul.f32 %v672, %v674
  %v676 = vadd.f32 %v672, %v675
  %vm677 = vweird.f32 %v524
  %vm678 = vweird.f32 %v672
  %vm679 = vmor %vm677, %vm678
  %v680 = vsel %vm679, %v672, %v676
  %v681 = vand.u32 2147483647, %v524
  %vm682 = vcmp.eq.f32.partialorder %v681, 8.507059e+37
  %v683 = vand.u32 %v524, 2147483648
  %v684 = vor.u32 1.1754944e-38, %v683
  %v685 = vsel %vm682, %v684, %v680
  %v686 = vmul.f32 1.0, %v685
  %v687 = vrcp.pop %v525
  %v688 = vmul.f32 %v525, %v687
  %v689 = vsub.f32 1.0, %v688
  %v690 = vmul.f32 %v687, %v689
  %v691 = vadd.f32 %v687, %v690
  %vm692 = vweird.f32 %v525
  %vm693 = vweird.f32 %v687
  %vm694 = vmor %vm692, %vm693
  %v695 = vsel %vm694, %v687, %v691
  %v696 = vand.u32 2147483647, %v525
  %vm697 = vcmp.eq.f32.partialorder %v696, 8.507059e+37
  %v698 = vand.u32 %v525, 2147483648
  %v699 = vor.u32 1.1754944e-38, %v698
  %v700 = vsel %vm697, %v699, %v695
  %v701 = vmul.f32 1.0, %v700
  %v702 = vrcp.pop %v526
  %v703 = vmul.f32 %v526, %v702
  %v704 = vsub.f32 1.0, %v703
  %v705 = vmul.f32 %v702, %v704
  %v706 = vadd.f32 %v702, %v705
  %vm707 = vweird.f32 %v526
  %vm708 = vweird.f32 %v702
  %vm709 = vmor %vm707, %vm708
  %v710 = vsel %vm709, %v702, %v706
  %v711 = vand.u32 2147483647, %v526
  %vm712 = vcmp.eq.f32.partialorder %v711, 8.507059e+37
  %v713 = vand.u32 %v526, 2147483648
  %v714 = vor.u32 1.1754944e-38, %v713
  %v715 = vsel %vm712, %v714, %v710
  %v716 = vmul.f32 1.0, %v715
  %v717 = vrcp.pop %v527
  %v718 = vmul.f32 %v527, %v717
  %v719 = vsub.f32 1.0, %v718
  %v720 = vmul.f32 %v717, %v719
  %v721 = vadd.f32 %v717, %v720
  %vm722 = vweird.f32 %v527
  %vm723 = vweird.f32 %v717
  %vm724 = vmor %vm722, %vm723
  %v725 = vsel %vm724, %v717, %v721
  %v726 = vand.u32 2147483647, %v527
  %vm727 = vcmp.eq.f32.partialorder %v726, 8.507059e+37
  %v728 = vand.u32 %v527, 2147483648
  %v729 = vor.u32 1.1754944e-38, %v728
  %v730 = vsel %vm727, %v729, %v725
  %v731 = vmul.f32 1.0, %v730
  %v732 = vrcp.pop %v528
  %v733 = vmul.f32 %v528, %v732
  %v734 = vsub.f32 1.0, %v733
  %v735 = vmul.f32 %v732, %v734
  %v736 = vadd.f32 %v732, %v735
  %vm737 = vweird.f32 %v528
  %vm738 = vweird.f32 %v732
  %vm739 = vmor %vm737, %vm738
  %v740 = vsel %vm739, %v732, %v736
  %v741 = vand.u32 2147483647, %v528
  %vm742 = vcmp.eq.f32.partialorder %v741, 8.507059e+37
  %v743 = vand.u32 %v528, 2147483648
  %v744 = vor.u32 1.1754944e-38, %v743
  %v745 = vsel %vm742, %v744, %v740
  %v746 = vmul.f32 1.0, %v745
  %v747 = vrcp.pop %v529
  %v748 = vmul.f32 %v529, %v747
  %v749 = vsub.f32 1.0, %v748
  %v750 = vmul.f32 %v747, %v749
  %v751 = vadd.f32 %v747, %v750
  %vm752 = vweird.f32 %v529
  %vm753 = vweird.f32 %v747
  %vm754 = vmor %vm752, %vm753
  %v755 = vsel %vm754, %v747, %v751
  %v756 = vand.u32 2147483647, %v529
  %vm757 = vcmp.eq.f32.partialorder %v756, 8.507059e+37
  %v758 = vand.u32 %v529, 2147483648
  %v759 = vor.u32 1.1754944e-38, %v758
  %v760 = vsel %vm757, %v759, %v755
  %v761 = vmul.f32 1.0, %v760
  %v762 = vrcp.pop %v530
  %v763 = vmul.f32 %v530, %v762
  %v764 = vsub.f32 1.0, %v763
  %v765 = vmul.f32 %v762, %v764
  %v766 = vadd.f32 %v762, %v765
  %vm767 = vweird.f32 %v530
  %vm768 = vweird.f32 %v762
  %vm769 = vmor %vm767, %vm768
  %v770 = vsel %vm769, %v762, %v766
  %v771 = vand.u32 2147483647, %v530
  %vm772 = vcmp.eq.f32.partialorder %v771, 8.507059e+37
  %v773 = vand.u32 %v530, 2147483648
  %v774 = vor.u32 1.1754944e-38, %v773
  %v775 = vsel %vm772, %v774, %v770
  %v776 = vmul.f32 1.0, %v775
  %v777 = vrcp.pop %v531
  %v778 = vmul.f32 %v531, %v777
  %v779 = vsub.f32 1.0, %v778
  %v780 = vmul.f32 %v777, %v779
  %v781 = vadd.f32 %v777, %v780
  %vm782 = vweird.f32 %v531
  %vm783 = vweird.f32 %v777
  %vm784 = vmor %vm782, %vm783
  %v785 = vsel %vm784, %v777, %v781
  %v786 = vand.u32 2147483647, %v531
  %vm787 = vcmp.eq.f32.partialorder %v786, 8.507059e+37
  %v788 = vand.u32 %v531, 2147483648
  %v789 = vor.u32 1.1754944e-38, %v788
  %v790 = vsel %vm787, %v789, %v785
  %v791 = vmul.f32 1.0, %v790
  %v792 = vrcp.pop %v532
  %v793 = vmul.f32 %v532, %v792
  %v794 = vsub.f32 1.0, %v793
  %v795 = vmul.f32 %v792, %v794
  %v796 = vadd.f32 %v792, %v795
  %vm797 = vweird.f32 %v532
  %vm798 = vweird.f32 %v792
  %vm799 = vmor %vm797, %vm798
  %v800 = vsel %vm799, %v792, %v796
  %v801 = vand.u32 2147483647, %v532
  %vm802 = vcmp.eq.f32.partialorder %v801, 8.507059e+37
  %v803 = vand.u32 %v532, 2147483648
  %v804 = vor.u32 1.1754944e-38, %v803
  %v805 = vsel %vm802, %v804, %v800
  %v806 = vmul.f32 1.0, %v805
  %v807 = vrcp.pop %v533
  %v808 = vmul.f32 %v533, %v807
  %v809 = vsub.f32 1.0, %v808
  %v810 = vmul.f32 %v807, %v809
  %v811 = vadd.f32 %v807, %v810
  %vm812 = vweird.f32 %v533
  %vm813 = vweird.f32 %v807
  %vm814 = vmor %vm812, %vm813
  %v815 = vsel %vm814, %v807, %v811
  %v816 = vand.u32 2147483647, %v533
  %vm817 = vcmp.eq.f32.partialorder %v816, 8.507059e+37
  %v818 = vand.u32 %v533, 2147483648
  %v819 = vor.u32 1.1754944e-38, %v818
  %v820 = vsel %vm817, %v819, %v815
  %v821 = vmul.f32 1.0, %v820
  %v822 = vrcp.pop %v534
  %v823 = vmul.f32 %v534, %v822
  %v824 = vsub.f32 1.0, %v823
  %v825 = vmul.f32 %v822, %v824
  %v826 = vadd.f32 %v822, %v825
  %vm827 = vweird.f32 %v534
  %vm828 = vweird.f32 %v822
  %vm829 = vmor %vm827, %vm828
  %v830 = vsel %vm829, %v822, %v826
  %v831 = vand.u32 2147483647, %v534
  %vm832 = vcmp.eq.f32.partialorder %v831, 8.507059e+37
  %v833 = vand.u32 %v534, 2147483648
  %v834 = vor.u32 1.1754944e-38, %v833
  %v835 = vsel %vm832, %v834, %v830
  %v836 = vmul.f32 1.0, %v835
  %v837 = vrcp.pop %v535
  %v838 = vmul.f32 %v535, %v837
  %v839 = vsub.f32 1.0, %v838
  %v840 = vmul.f32 %v837, %v839
  %v841 = vadd.f32 %v837, %v840
  %vm842 = vweird.f32 %v535
  %vm843 = vweird.f32 %v837
  %vm844 = vmor %vm842, %vm843
  %v845 = vsel %vm844, %v837, %v841
  %v846 = vand.u32 2147483647, %v535
  %vm847 = vcmp.eq.f32.partialorder %v846, 8.507059e+37
  %v848 = vand.u32 %v535, 2147483648
  %v849 = vor.u32 1.1754944e-38, %v848
  %v850 = vsel %vm847, %v849, %v845
  %v851 = vmul.f32 1.0, %v850
  %v852 = vrcp.pop %v536
  %v853 = vmul.f32 %v536, %v852
  %v854 = vsub.f32 1.0, %v853
  %v855 = vmul.f32 %v852, %v854
  %v856 = vadd.f32 %v852, %v855
  %vm857 = vweird.f32 %v536
  %vm858 = vweird.f32 %v852
  %vm859 = vmor %vm857, %vm858
  %v860 = vsel %vm859, %v852, %v856
  %v861 = vand.u32 2147483647, %v536
  %vm862 = vcmp.eq.f32.partialorder %v861, 8.507059e+37
  %v863 = vand.u32 %v536, 2147483648
  %v864 = vor.u32 1.1754944e-38, %v863
  %v865 = vsel %vm862, %v864, %v860
  %v866 = vmul.f32 1.0, %v865
  %v867 = vrcp.pop %v537
  %v868 = vmul.f32 %v537, %v867
  %v869 = vsub.f32 1.0, %v868
  %v870 = vmul.f32 %v867, %v869
  %v871 = vadd.f32 %v867, %v870
  %vm872 = vweird.f32 %v537
  %vm873 = vweird.f32 %v867
  %vm874 = vmor %vm872, %vm873
  %v875 = vsel %vm874, %v867, %v871
  %v876 = vand.u32 2147483647, %v537
  %vm877 = vcmp.eq.f32.partialorder %v876, 8.507059e+37
  %v878 = vand.u32 %v537, 2147483648
  %v879 = vor.u32 1.1754944e-38, %v878
  %v880 = vsel %vm877, %v879, %v875
  %v881 = vmul.f32 1.0, %v880
  %v882 = vrcp.pop %v538
  %v883 = vmul.f32 %v538, %v882
  %v884 = vsub.f32 1.0, %v883
  %v885 = vmul.f32 %v882, %v884
  %v886 = vadd.f32 %v882, %v885
  %vm887 = vweird.f32 %v538
  %vm888 = vweird.f32 %v882
  %vm889 = vmor %vm887, %vm888
  %v890 = vsel %vm889, %v882, %v886
  %v891 = vand.u32 2147483647, %v538
  %vm892 = vcmp.eq.f32.partialorder %v891, 8.507059e+37
  %v893 = vand.u32 %v538, 2147483648
  %v894 = vor.u32 1.1754944e-38, %v893
  %v895 = vsel %vm892, %v894, %v890
  %v896 = vmul.f32 1.0, %v895
  %v897 = vrcp.pop %v539
  %v898 = vmul.f32 %v539, %v897
  %v899 = vsub.f32 1.0, %v898
  %v900 = vmul.f32 %v897, %v899
  %v901 = vadd.f32 %v897, %v900
  %vm902 = vweird.f32 %v539
  %vm903 = vweird.f32 %v897
  %vm904 = vmor %vm902, %vm903
  %v905 = vsel %vm904, %v897, %v901
  %v906 = vand.u32 2147483647, %v539
  %vm907 = vcmp.eq.f32.partialorder %v906, 8.507059e+37
  %v908 = vand.u32 %v539, 2147483648
  %v909 = vor.u32 1.1754944e-38, %v908
  %v910 = vsel %vm907, %v909, %v905
  %v911 = vmul.f32 1.0, %v910
  %v912 = vrcp.pop %v540
  %v913 = vmul.f32 %v540, %v912
  %v914 = vsub.f32 1.0, %v913
  %v915 = vmul.f32 %v912, %v914
  %v916 = vadd.f32 %v912, %v915
  %vm917 = vweird.f32 %v540
  %vm918 = vweird.f32 %v912
  %vm919 = vmor %vm917, %vm918
  %v920 = vsel %vm919, %v912, %v916
  %v921 = vand.u32 2147483647, %v540
  %vm922 = vcmp.eq.f32.partialorder %v921, 8.507059e+37
  %v923 = vand.u32 %v540, 2147483648
  %v924 = vor.u32 1.1754944e-38, %v923
  %v925 = vsel %vm922, %v924, %v920
  %v926 = vmul.f32 1.0, %v925
  %v927 = vrcp.pop %v541
  %v928 = vmul.f32 %v541, %v927
  %v929 = vsub.f32 1.0, %v928
  %v930 = vmul.f32 %v927, %v929
  %v931 = vadd.f32 %v927, %v930
  %vm932 = vweird.f32 %v541
  %vm933 = vweird.f32 %v927
  %vm934 = vmor %vm932, %vm933
  %v935 = vsel %vm934, %v927, %v931
  %v936 = vand.u32 2147483647, %v541
  %vm937 = vcmp.eq.f32.partialorder %v936, 8.507059e+37
  %v938 = vand.u32 %v541, 2147483648
  %v939 = vor.u32 1.1754944e-38, %v938
  %v940 = vsel %vm937, %v939, %v935
  %v941 = vmul.f32 1.0, %v940
  %v942 = vrcp.pop %v542
  %v943 = vmul.f32 %v542, %v942
  %v944 = vsub.f32 1.0, %v943
  %v945 = vmul.f32 %v942, %v944
  %v946 = vadd.f32 %v942, %v945
  %vm947 = vweird.f32 %v542
  %vm948 = vweird.f32 %v942
  %vm949 = vmor %vm947, %vm948
  %v950 = vsel %vm949, %v942, %v946
  %v951 = vand.u32 2147483647, %v542
  %vm952 = vcmp.eq.f32.partialorder %v951, 8.507059e+37
  %v953 = vand.u32 %v542, 2147483648
  %v954 = vor.u32 1.1754944e-38, %v953
  %v955 = vsel %vm952, %v954, %v950
  %v956 = vmul.f32 1.0, %v955
  %v957 = vrcp.pop %v543
  %v958 = vmul.f32 %v543, %v957
  %v959 = vsub.f32 1.0, %v958
  %v960 = vmul.f32 %v957, %v959
  %v961 = vadd.f32 %v957, %v960
  %vm962 = vweird.f32 %v543
  %vm963 = vweird.f32 %v957
  %vm964 = vmor %vm962, %vm963
  %v965 = vsel %vm964, %v957, %v961
  %v966 = vand.u32 2147483647, %v543
  %vm967 = vcmp.eq.f32.partialorder %v966, 8.507059e+37
  %v968 = vand.u32 %v543, 2147483648
  %v969 = vor.u32 1.1754944e-38, %v968
  %v970 = vsel %vm967, %v969, %v965
  %v971 = vmul.f32 1.0, %v970
  %v972 = vrcp.pop %v544
  %v973 = vmul.f32 %v544, %v972
  %v974 = vsub.f32 1.0, %v973
  %v975 = vmul.f32 %v972, %v974
  %v976 = vadd.f32 %v972, %v975
  %vm977 = vweird.f32 %v544
  %vm978 = vweird.f32 %v972
  %vm979 = vmor %vm977, %vm978
  %v980 = vsel %vm979, %v972, %v976
  %v981 = vand.u32 2147483647, %v544
  %vm982 = vcmp.eq.f32.partialorder %v981, 8.507059e+37
  %v983 = vand.u32 %v544, 2147483648
  %v984 = vor.u32 1.1754944e-38, %v983
  %v985 = vsel %vm982, %v984, %v980
  %v986 = vmul.f32 1.0, %v985
  %v987 = vrcp.pop %v545
  %v988 = vmul.f32 %v545, %v987
  %v989 = vsub.f32 1.0, %v988
  %v990 = vmul.f32 %v987, %v989
  %v991 = vadd.f32 %v987, %v990
  %vm992 = vweird.f32 %v545
  %vm993 = vweird.f32 %v987
  %vm994 = vmor %vm992, %vm993
  %v995 = vsel %vm994, %v987, %v991
  %v996 = vand.u32 2147483647, %v545
  %vm997 = vcmp.eq.f32.partialorder %v996, 8.507059e+37
  %v998 = vand.u32 %v545, 2147483648
  %v999 = vor.u32 1.1754944e-38, %v998
  %v1000 = vsel %vm997, %v999, %v995
  %v1001 = vmul.f32 1.0, %v1000
  %v1002 = vrcp.pop %v546
  %v1003 = vmul.f32 %v546, %v1002
  %v1004 = vsub.f32 1.0, %v1003
  %v1005 = vmul.f32 %v1002, %v1004
  %v1006 = vadd.f32 %v1002, %v1005
  %vm1007 = vweird.f32 %v546
  %vm1008 = vweird.f32 %v1002
  %vm1009 = vmor %vm1007, %vm1008
  %v1010 = vsel %vm1009, %v1002, %v1006
  %v1011 = vand.u32 2147483647, %v546
  %vm1012 = vcmp.eq.f32.partialorder %v1011, 8.507059e+37
  %v1013 = vand.u32 %v546, 2147483648
  %v1014 = vor.u32 1.1754944e-38, %v1013
  %v1015 = vsel %vm1012, %v1014, %v1010
  %v1016 = vmul.f32 1.0, %v1015
  %v1017 = vrcp.pop %v547
  %v1018 = vmul.f32 %v547, %v1017
  %v1019 = vsub.f32 1.0, %v1018
  %v1020 = vmul.f32 %v1017, %v1019
  %v1021 = vadd.f32 %v1017, %v1020
  %vm1022 = vweird.f32 %v547
  %vm1023 = vweird.f32 %v1017
  %vm1024 = vmor %vm1022, %vm1023
  %v1025 = vsel %vm1024, %v1017, %v1021
  %v1026 = vand.u32 2147483647, %v547
  %vm1027 = vcmp.eq.f32.partialorder %v1026, 8.507059e+37
  %v1028 = vand.u32 %v547, 2147483648
  %v1029 = vor.u32 1.1754944e-38, %v1028
  %v1030 = vsel %vm1027, %v1029, %v1025
  %v1031 = vmul.f32 1.0, %v1030
  %v1032 = vrcp.pop %v548
  %v1033 = vmul.f32 %v548, %v1032
  %v1034 = vsub.f32 1.0, %v1033
  %v1035 = vmul.f32 %v1032, %v1034
  %v1036 = vadd.f32 %v1032, %v1035
  %vm1037 = vweird.f32 %v548
  %vm1038 = vweird.f32 %v1032
  %vm1039 = vmor %vm1037, %vm1038
  %v1040 = vsel %vm1039, %v1032, %v1036
  %v1041 = vand.u32 2147483647, %v548
  %vm1042 = vcmp.eq.f32.partialorder %v1041, 8.507059e+37
  %v1043 = vand.u32 %v548, 2147483648
  %v1044 = vor.u32 1.1754944e-38, %v1043
  %v1045 = vsel %vm1042, %v1044, %v1040
  %v1046 = vmul.f32 1.0, %v1045
  %v1047 = vrcp.pop %v549
  %v1048 = vmul.f32 %v549, %v1047
  %v1049 = vsub.f32 1.0, %v1048
  %v1050 = vmul.f32 %v1047, %v1049
  %v1051 = vadd.f32 %v1047, %v1050
  %vm1052 = vweird.f32 %v549
  %vm1053 = vweird.f32 %v1047
  %vm1054 = vmor %vm1052, %vm1053
  %v1055 = vsel %vm1054, %v1047, %v1051
  %v1056 = vand.u32 2147483647, %v549
  %vm1057 = vcmp.eq.f32.partialorder %v1056, 8.507059e+37
  %v1058 = vand.u32 %v549, 2147483648
  %v1059 = vor.u32 1.1754944e-38, %v1058
  %v1060 = vsel %vm1057, %v1059, %v1055
  %v1061 = vmul.f32 1.0, %v1060
  %v1062 = vrcp.pop %v550
  %v1063 = vmul.f32 %v550, %v1062
  %v1064 = vsub.f32 1.0, %v1063
  %v1065 = vmul.f32 %v1062, %v1064
  %v1066 = vadd.f32 %v1062, %v1065
  %vm1067 = vweird.f32 %v550
  %vm1068 = vweird.f32 %v1062
  %vm1069 = vmor %vm1067, %vm1068
  %v1070 = vsel %vm1069, %v1062, %v1066
  %v1071 = vand.u32 2147483647, %v550
  %vm1072 = vcmp.eq.f32.partialorder %v1071, 8.507059e+37
  %v1073 = vand.u32 %v550, 2147483648
  %v1074 = vor.u32 1.1754944e-38, %v1073
  %v1075 = vsel %vm1072, %v1074, %v1070
  %v1076 = vmul.f32 1.0, %v1075
  %v1077 = vrcp.pop %v551
  %v1078 = vmul.f32 %v551, %v1077
  %v1079 = vsub.f32 1.0, %v1078
  %v1080 = vmul.f32 %v1077, %v1079
  %v1081 = vadd.f32 %v1077, %v1080
  %vm1082 = vweird.f32 %v551
  %vm1083 = vweird.f32 %v1077
  %vm1084 = vmor %vm1082, %vm1083
  %v1085 = vsel %vm1084, %v1077, %v1081
  %v1086 = vand.u32 2147483647, %v551
  %vm1087 = vcmp.eq.f32.partialorder %v1086, 8.507059e+37
  %v1088 = vand.u32 %v551, 2147483648
  %v1089 = vor.u32 1.1754944e-38, %v1088
  %v1090 = vsel %vm1087, %v1089, %v1085
  %v1091 = vmul.f32 1.0, %v1090
  %v1092 = vrcp.pop %v552
  %v1093 = vmul.f32 %v552, %v1092
  %v1094 = vsub.f32 1.0, %v1093
  %v1095 = vmul.f32 %v1092, %v1094
  %v1096 = vadd.f32 %v1092, %v1095
  %vm1097 = vweird.f32 %v552
  %vm1098 = vweird.f32 %v1092
  %vm1099 = vmor %vm1097, %vm1098
  %v1100 = vsel %vm1099, %v1092, %v1096
  %v1101 = vand.u32 2147483647, %v552
  %vm1102 = vcmp.eq.f32.partialorder %v1101, 8.507059e+37
  %v1103 = vand.u32 %v552, 2147483648
  %v1104 = vor.u32 1.1754944e-38, %v1103
  %v1105 = vsel %vm1102, %v1104, %v1100
  %v1106 = vmul.f32 1.0, %v1105
  %v1107 = vrcp.pop %v553
  %v1108 = vmul.f32 %v553, %v1107
  %v1109 = vsub.f32 1.0, %v1108
  %v1110 = vmul.f32 %v1107, %v1109
  %v1111 = vadd.f32 %v1107, %v1110
  %vm1112 = vweird.f32 %v553
  %vm1113 = vweird.f32 %v1107
  %vm1114 = vmor %vm1112, %vm1113
  %v1115 = vsel %vm1114, %v1107, %v1111
  %v1116 = vand.u32 2147483647, %v553
  %vm1117 = vcmp.eq.f32.partialorder %v1116, 8.507059e+37
  %v1118 = vand.u32 %v553, 2147483648
  %v1119 = vor.u32 1.1754944e-38, %v1118
  %v1120 = vsel %vm1117, %v1119, %v1115
  %v1121 = vmul.f32 1.0, %v1120
  %v1122 = vrcp.pop %v554
  %v1123 = vmul.f32 %v554, %v1122
  %v1124 = vsub.f32 1.0, %v1123
  %v1125 = vmul.f32 %v1122, %v1124
  %v1126 = vadd.f32 %v1122, %v1125
  %vm1127 = vweird.f32 %v554
  %vm1128 = vweird.f32 %v1122
  %vm1129 = vmor %vm1127, %vm1128
  %v1130 = vsel %vm1129, %v1122, %v1126
  %v1131 = vand.u32 2147483647, %v554
  %vm1132 = vcmp.eq.f32.partialorder %v1131, 8.507059e+37
  %v1133 = vand.u32 %v554, 2147483648
  %v1134 = vor.u32 1.1754944e-38, %v1133
  %v1135 = vsel %vm1132, %v1134, %v1130
  %v1136 = vmul.f32 1.0, %v1135
  %v1137 = vrcp.pop %v555
  %v1138 = vmul.f32 %v555, %v1137
  %v1139 = vsub.f32 1.0, %v1138
  %v1140 = vmul.f32 %v1137, %v1139
  %v1141 = vadd.f32 %v1137, %v1140
  %vm1142 = vweird.f32 %v555
  %vm1143 = vweird.f32 %v1137
  %vm1144 = vmor %vm1142, %vm1143
  %v1145 = vsel %vm1144, %v1137, %v1141
  %v1146 = vand.u32 2147483647, %v555
  %vm1147 = vcmp.eq.f32.partialorder %v1146, 8.507059e+37
  %v1148 = vand.u32 %v555, 2147483648
  %v1149 = vor.u32 1.1754944e-38, %v1148
  %v1150 = vsel %vm1147, %v1149, %v1145
  %v1151 = vmul.f32 1.0, %v1150
  %v1152 = vrcp.pop %v556
  %v1153 = vmul.f32 %v556, %v1152
  %v1154 = vsub.f32 1.0, %v1153
  %v1155 = vmul.f32 %v1152, %v1154
  %v1156 = vadd.f32 %v1152, %v1155
  %vm1157 = vweird.f32 %v556
  %vm1158 = vweird.f32 %v1152
  %vm1159 = vmor %vm1157, %vm1158
  %v1160 = vsel %vm1159, %v1152, %v1156
  %v1161 = vand.u32 2147483647, %v556
  %vm1162 = vcmp.eq.f32.partialorder %v1161, 8.507059e+37
  %v1163 = vand.u32 %v556, 2147483648
  %v1164 = vor.u32 1.1754944e-38, %v1163
  %v1165 = vsel %vm1162, %v1164, %v1160
  %v1166 = vmul.f32 1.0, %v1165
  %v1167 = vrcp.pop %v557
  %v1168 = vmul.f32 %v557, %v1167
  %v1169 = vsub.f32 1.0, %v1168
  %v1170 = vmul.f32 %v1167, %v1169
  %v1171 = vadd.f32 %v1167, %v1170
  %vm1172 = vweird.f32 %v557
  %vm1173 = vweird.f32 %v1167
  %vm1174 = vmor %vm1172, %vm1173
  %v1175 = vsel %vm1174, %v1167, %v1171
  %v1176 = vand.u32 2147483647, %v557
  %vm1177 = vcmp.eq.f32.partialorder %v1176, 8.507059e+37
  %v1178 = vand.u32 %v557, 2147483648
  %v1179 = vor.u32 1.1754944e-38, %v1178
  %v1180 = vsel %vm1177, %v1179, %v1175
  %v1181 = vmul.f32 1.0, %v1180
  %v1182 = vrcp.pop %v558
  %v1183 = vmul.f32 %v558, %v1182
  %v1184 = vsub.f32 1.0, %v1183
  %v1185 = vmul.f32 %v1182, %v1184
  %v1186 = vadd.f32 %v1182, %v1185
  %vm1187 = vweird.f32 %v558
  %vm1188 = vweird.f32 %v1182
  %vm1189 = vmor %vm1187, %vm1188
  %v1190 = vsel %vm1189, %v1182, %v1186
  %v1191 = vand.u32 2147483647, %v558
  %vm1192 = vcmp.eq.f32.partialorder %v1191, 8.507059e+37
  %v1193 = vand.u32 %v558, 2147483648
  %v1194 = vor.u32 1.1754944e-38, %v1193
  %v1195 = vsel %vm1192, %v1194, %v1190
  %v1196 = vmul.f32 1.0, %v1195
  %v1197 = vrcp.pop %v559
  %v1198 = vmul.f32 %v559, %v1197
  %v1199 = vsub.f32 1.0, %v1198
  %v1200 = vmul.f32 %v1197, %v1199
  %v1201 = vadd.f32 %v1197, %v1200
  %vm1202 = vweird.f32 %v559
  %vm1203 = vweird.f32 %v1197
  %vm1204 = vmor %vm1202, %vm1203
  %v1205 = vsel %vm1204, %v1197, %v1201
  %v1206 = vand.u32 2147483647, %v559
  %vm1207 = vcmp.eq.f32.partialorder %v1206, 8.507059e+37
  %v1208 = vand.u32 %v559, 2147483648
  %v1209 = vor.u32 1.1754944e-38, %v1208
  %v1210 = vsel %vm1207, %v1209, %v1205
  %v1211 = vmul.f32 1.0, %v1210
  %v1212 = vrcp.pop %v560
  %v1213 = vmul.f32 %v560, %v1212
  %v1214 = vsub.f32 1.0, %v1213
  %v1215 = vmul.f32 %v1212, %v1214
  %v1216 = vadd.f32 %v1212, %v1215
  %vm1217 = vweird.f32 %v560
  %vm1218 = vweird.f32 %v1212
  %vm1219 = vmor %vm1217, %vm1218
  %v1220 = vsel %vm1219, %v1212, %v1216
  %v1221 = vand.u32 2147483647, %v560
  %vm1222 = vcmp.eq.f32.partialorder %v1221, 8.507059e+37
  %v1223 = vand.u32 %v560, 2147483648
  %v1224 = vor.u32 1.1754944e-38, %v1223
  %v1225 = vsel %vm1222, %v1224, %v1220
  %v1226 = vmul.f32 1.0, %v1225
  %v1227 = vrcp.pop %v561
  %v1228 = vmul.f32 %v561, %v1227
  %v1229 = vsub.f32 1.0, %v1228
  %v1230 = vmul.f32 %v1227, %v1229
  %v1231 = vadd.f32 %v1227, %v1230
  %vm1232 = vweird.f32 %v561
  %vm1233 = vweird.f32 %v1227
  %vm1234 = vmor %vm1232, %vm1233
  %v1235 = vsel %vm1234, %v1227, %v1231
  %v1236 = vand.u32 2147483647, %v561
  %vm1237 = vcmp.eq.f32.partialorder %v1236, 8.507059e+37
  %v1238 = vand.u32 %v561, 2147483648
  %v1239 = vor.u32 1.1754944e-38, %v1238
  %v1240 = vsel %vm1237, %v1239, %v1235
  %v1241 = vmul.f32 1.0, %v1240
  %v1242 = vrcp.pop %v562
  %v1243 = vmul.f32 %v562, %v1242
  %v1244 = vsub.f32 1.0, %v1243
  %v1245 = vmul.f32 %v1242, %v1244
  %v1246 = vadd.f32 %v1242, %v1245
  %vm1247 = vweird.f32 %v562
  %vm1248 = vweird.f32 %v1242
  %vm1249 = vmor %vm1247, %vm1248
  %v1250 = vsel %vm1249, %v1242, %v1246
  %v1251 = vand.u32 2147483647, %v562
  %vm1252 = vcmp.eq.f32.partialorder %v1251, 8.507059e+37
  %v1253 = vand.u32 %v562, 2147483648
  %v1254 = vor.u32 1.1754944e-38, %v1253
  %v1255 = vsel %vm1252, %v1254, %v1250
  %v1256 = vmul.f32 1.0, %v1255
  %v1257 = vrcp.pop %v563
  %v1258 = vmul.f32 %v563, %v1257
  %v1259 = vsub.f32 1.0, %v1258
  %v1260 = vmul.f32 %v1257, %v1259
  %v1261 = vadd.f32 %v1257, %v1260
  %vm1262 = vweird.f32 %v563
  %vm1263 = vweird.f32 %v1257
  %vm1264 = vmor %vm1262, %vm1263
  %v1265 = vsel %vm1264, %v1257, %v1261
  %v1266 = vand.u32 2147483647, %v563
  %vm1267 = vcmp.eq.f32.partialorder %v1266, 8.507059e+37
  %v1268 = vand.u32 %v563, 2147483648
  %v1269 = vor.u32 1.1754944e-38, %v1268
  %v1270 = vsel %vm1267, %v1269, %v1265
  %v1271 = vmul.f32 1.0, %v1270
  %v1272 = vrcp.pop %v564
  %v1273 = vmul.f32 %v564, %v1272
  %v1274 = vsub.f32 1.0, %v1273
  %v1275 = vmul.f32 %v1272, %v1274
  %v1276 = vadd.f32 %v1272, %v1275
  %vm1277 = vweird.f32 %v564
  %vm1278 = vweird.f32 %v1272
  %vm1279 = vmor %vm1277, %vm1278
  %v1280 = vsel %vm1279, %v1272, %v1276
  %v1281 = vand.u32 2147483647, %v564
  %vm1282 = vcmp.eq.f32.partialorder %v1281, 8.507059e+37
  %v1283 = vand.u32 %v564, 2147483648
  %v1284 = vor.u32 1.1754944e-38, %v1283
  %v1285 = vsel %vm1282, %v1284, %v1280
  %v1286 = vmul.f32 1.0, %v1285
  %v1287 = vrcp.pop %v565
  %v1288 = vmul.f32 %v565, %v1287
  %v1289 = vsub.f32 1.0, %v1288
  %v1290 = vmul.f32 %v1287, %v1289
  %v1291 = vadd.f32 %v1287, %v1290
  %vm1292 = vweird.f32 %v565
  %vm1293 = vweird.f32 %v1287
  %vm1294 = vmor %vm1292, %vm1293
  %v1295 = vsel %vm1294, %v1287, %v1291
  %v1296 = vand.u32 2147483647, %v565
  %vm1297 = vcmp.eq.f32.partialorder %v1296, 8.507059e+37
  %v1298 = vand.u32 %v565, 2147483648
  %v1299 = vor.u32 1.1754944e-38, %v1298
  %v1300 = vsel %vm1297, %v1299, %v1295
  %v1301 = vmul.f32 1.0, %v1300
  %v1302 = vrcp.pop %v566
  %v1303 = vmul.f32 %v566, %v1302
  %v1304 = vsub.f32 1.0, %v1303
  %v1305 = vmul.f32 %v1302, %v1304
  %v1306 = vadd.f32 %v1302, %v1305
  %vm1307 = vweird.f32 %v566
  %vm1308 = vweird.f32 %v1302
  %vm1309 = vmor %vm1307, %vm1308
  %v1310 = vsel %vm1309, %v1302, %v1306
  %v1311 = vand.u32 2147483647, %v566
  %vm1312 = vcmp.eq.f32.partialorder %v1311, 8.507059e+37
  %v1313 = vand.u32 %v566, 2147483648
  %v1314 = vor.u32 1.1754944e-38, %v1313
  %v1315 = vsel %vm1312, %v1314, %v1310
  %v1316 = vmul.f32 1.0, %v1315
  %v1317 = vrcp.pop %v567
  %v1318 = vmul.f32 %v567, %v1317
  %v1319 = vsub.f32 1.0, %v1318
  %v1320 = vmul.f32 %v1317, %v1319
  %v1321 = vadd.f32 %v1317, %v1320
  %vm1322 = vweird.f32 %v567
  %vm1323 = vweird.f32 %v1317
  %vm1324 = vmor %vm1322, %vm1323
  %v1325 = vsel %vm1324, %v1317, %v1321
  %v1326 = vand.u32 2147483647, %v567
  %vm1327 = vcmp.eq.f32.partialorder %v1326, 8.507059e+37
  %v1328 = vand.u32 %v567, 2147483648
  %v1329 = vor.u32 1.1754944e-38, %v1328
  %v1330 = vsel %vm1327, %v1329, %v1325
  %v1331 = vmul.f32 1.0, %v1330
  %v1332 = vrcp.pop %v568
  %v1333 = vmul.f32 %v568, %v1332
  %v1334 = vsub.f32 1.0, %v1333
  %v1335 = vmul.f32 %v1332, %v1334
  %v1336 = vadd.f32 %v1332, %v1335
  %vm1337 = vweird.f32 %v568
  %vm1338 = vweird.f32 %v1332
  %vm1339 = vmor %vm1337, %vm1338
  %v1340 = vsel %vm1339, %v1332, %v1336
  %v1341 = vand.u32 2147483647, %v568
  %vm1342 = vcmp.eq.f32.partialorder %v1341, 8.507059e+37
  %v1343 = vand.u32 %v568, 2147483648
  %v1344 = vor.u32 1.1754944e-38, %v1343
  %v1345 = vsel %vm1342, %v1344, %v1340
  %v1346 = vmul.f32 1.0, %v1345
  %v1347 = vrcp.pop %v569
  %v1348 = vmul.f32 %v569, %v1347
  %v1349 = vsub.f32 1.0, %v1348
  %v1350 = vmul.f32 %v1347, %v1349
  %v1351 = vadd.f32 %v1347, %v1350
  %vm1352 = vweird.f32 %v569
  %vm1353 = vweird.f32 %v1347
  %vm1354 = vmor %vm1352, %vm1353
  %v1355 = vsel %vm1354, %v1347, %v1351
  %v1356 = vand.u32 2147483647, %v569
  %vm1357 = vcmp.eq.f32.partialorder %v1356, 8.507059e+37
  %v1358 = vand.u32 %v569, 2147483648
  %v1359 = vor.u32 1.1754944e-38, %v1358
  %v1360 = vsel %vm1357, %v1359, %v1355
  %v1361 = vmul.f32 1.0, %v1360
  %v1362 = vrcp.pop %v570
  %v1363 = vmul.f32 %v570, %v1362
  %v1364 = vsub.f32 1.0, %v1363
  %v1365 = vmul.f32 %v1362, %v1364
  %v1366 = vadd.f32 %v1362, %v1365
  %vm1367 = vweird.f32 %v570
  %vm1368 = vweird.f32 %v1362
  %vm1369 = vmor %vm1367, %vm1368
  %v1370 = vsel %vm1369, %v1362, %v1366
  %v1371 = vand.u32 2147483647, %v570
  %vm1372 = vcmp.eq.f32.partialorder %v1371, 8.507059e+37
  %v1373 = vand.u32 %v570, 2147483648
  %v1374 = vor.u32 1.1754944e-38, %v1373
  %v1375 = vsel %vm1372, %v1374, %v1370
  %v1376 = vmul.f32 1.0, %v1375
  %v1377 = vrcp.pop %v571
  %v1378 = vmul.f32 %v571, %v1377
  %v1379 = vsub.f32 1.0, %v1378
  %v1380 = vmul.f32 %v1377, %v1379
  %v1381 = vadd.f32 %v1377, %v1380
  %vm1382 = vweird.f32 %v571
  %vm1383 = vweird.f32 %v1377
  %vm1384 = vmor %vm1382, %vm1383
  %v1385 = vsel %vm1384, %v1377, %v1381
  %v1386 = vand.u32 2147483647, %v571
  %vm1387 = vcmp.eq.f32.partialorder %v1386, 8.507059e+37
  %v1388 = vand.u32 %v571, 2147483648
  %v1389 = vor.u32 1.1754944e-38, %v1388
  %v1390 = vsel %vm1387, %v1389, %v1385
  %v1391 = vmul.f32 1.0, %v1390
  %v1392 = vrcp.pop %v572
  %v1393 = vmul.f32 %v572, %v1392
  %v1394 = vsub.f32 1.0, %v1393
  %v1395 = vmul.f32 %v1392, %v1394
  %v1396 = vadd.f32 %v1392, %v1395
  %vm1397 = vweird.f32 %v572
  %vm1398 = vweird.f32 %v1392
  %vm1399 = vmor %vm1397, %vm1398
  %v1400 = vsel %vm1399, %v1392, %v1396
  %v1401 = vand.u32 2147483647, %v572
  %vm1402 = vcmp.eq.f32.partialorder %v1401, 8.507059e+37
  %v1403 = vand.u32 %v572, 2147483648
  %v1404 = vor.u32 1.1754944e-38, %v1403
  %v1405 = vsel %vm1402, %v1404, %v1400
  %v1406 = vmul.f32 1.0, %v1405
  %v1407 = vrcp.pop %v573
  %v1408 = vmul.f32 %v573, %v1407
  %v1409 = vsub.f32 1.0, %v1408
  %v1410 = vmul.f32 %v1407, %v1409
  %v1411 = vadd.f32 %v1407, %v1410
  %vm1412 = vweird.f32 %v573
  %vm1413 = vweird.f32 %v1407
  %vm1414 = vmor %vm1412, %vm1413
  %v1415 = vsel %vm1414, %v1407, %v1411
  %v1416 = vand.u32 2147483647, %v573
  %vm1417 = vcmp.eq.f32.partialorder %v1416, 8.507059e+37
  %v1418 = vand.u32 %v573, 2147483648
  %v1419 = vor.u32 1.1754944e-38, %v1418
  %v1420 = vsel %vm1417, %v1419, %v1415
  %v1421 = vmul.f32 1.0, %v1420
  %v1422 = vrcp.pop %v574
  %v1423 = vmul.f32 %v574, %v1422
  %v1424 = vsub.f32 1.0, %v1423
  %v1425 = vmul.f32 %v1422, %v1424
  %v1426 = vadd.f32 %v1422, %v1425
  %vm1427 = vweird.f32 %v574
  %vm1428 = vweird.f32 %v1422
  %vm1429 = vmor %vm1427, %vm1428
  %v1430 = vsel %vm1429, %v1422, %v1426
  %v1431 = vand.u32 2147483647, %v574
  %vm1432 = vcmp.eq.f32.partialorder %v1431, 8.507059e+37
  %v1433 = vand.u32 %v574, 2147483648
  %v1434 = vor.u32 1.1754944e-38, %v1433
  %v1435 = vsel %vm1432, %v1434, %v1430
  %v1436 = vmul.f32 1.0, %v1435
  %v1437 = vrcp.pop %v575
  %v1438 = vmul.f32 %v575, %v1437
  %v1439 = vsub.f32 1.0, %v1438
  %v1440 = vmul.f32 %v1437, %v1439
  %v1441 = vadd.f32 %v1437, %v1440
  %vm1442 = vweird.f32 %v575
  %vm1443 = vweird.f32 %v1437
  %vm1444 = vmor %vm1442, %vm1443
  %v1445 = vsel %vm1444, %v1437, %v1441
  %v1446 = vand.u32 2147483647, %v575
  %vm1447 = vcmp.eq.f32.partialorder %v1446, 8.507059e+37
  %v1448 = vand.u32 %v575, 2147483648
  %v1449 = vor.u32 1.1754944e-38, %v1448
  %v1450 = vsel %vm1447, %v1449, %v1445
  %v1451 = vmul.f32 1.0, %v1450
  %v1452 = vrcp.pop %v576
  %v1453 = vmul.f32 %v576, %v1452
  %v1454 = vsub.f32 1.0, %v1453
  %v1455 = vmul.f32 %v1452, %v1454
  %v1456 = vadd.f32 %v1452, %v1455
  %vm1457 = vweird.f32 %v576
  %vm1458 = vweird.f32 %v1452
  %vm1459 = vmor %vm1457, %vm1458
  %v1460 = vsel %vm1459, %v1452, %v1456
  %v1461 = vand.u32 2147483647, %v576
  %vm1462 = vcmp.eq.f32.partialorder %v1461, 8.507059e+37
  %v1463 = vand.u32 %v576, 2147483648
  %v1464 = vor.u32 1.1754944e-38, %v1463
  %v1465 = vsel %vm1462, %v1464, %v1460
  %v1466 = vmul.f32 1.0, %v1465
  %v1467 = vrcp.pop %v577
  %v1468 = vmul.f32 %v577, %v1467
  %v1469 = vsub.f32 1.0, %v1468
  %v1470 = vmul.f32 %v1467, %v1469
  %v1471 = vadd.f32 %v1467, %v1470
  %vm1472 = vweird.f32 %v577
  %vm1473 = vweird.f32 %v1467
  %vm1474 = vmor %vm1472, %vm1473
  %v1475 = vsel %vm1474, %v1467, %v1471
  %v1476 = vand.u32 2147483647, %v577
  %vm1477 = vcmp.eq.f32.partialorder %v1476, 8.507059e+37
  %v1478 = vand.u32 %v577, 2147483648
  %v1479 = vor.u32 1.1754944e-38, %v1478
  %v1480 = vsel %vm1477, %v1479, %v1475
  %v1481 = vmul.f32 1.0, %v1480
  %v1482 = vrcp.pop %v578
  %v1483 = vmul.f32 %v578, %v1482
  %v1484 = vsub.f32 1.0, %v1483
  %v1485 = vmul.f32 %v1482, %v1484
  %v1486 = vadd.f32 %v1482, %v1485
  %vm1487 = vweird.f32 %v578
  %vm1488 = vweird.f32 %v1482
  %vm1489 = vmor %vm1487, %vm1488
  %v1490 = vsel %vm1489, %v1482, %v1486
  %v1491 = vand.u32 2147483647, %v578
  %vm1492 = vcmp.eq.f32.partialorder %v1491, 8.507059e+37
  %v1493 = vand.u32 %v578, 2147483648
  %v1494 = vor.u32 1.1754944e-38, %v1493
  %v1495 = vsel %vm1492, %v1494, %v1490
  %v1496 = vmul.f32 1.0, %v1495
  %v1497 = vrcp.pop %v579
  %v1498 = vmul.f32 %v579, %v1497
  %v1499 = vsub.f32 1.0, %v1498
  %v1500 = vmul.f32 %v1497, %v1499
  %v1501 = vadd.f32 %v1497, %v1500
  %vm1502 = vweird.f32 %v579
  %vm1503 = vweird.f32 %v1497
  %vm1504 = vmor %vm1502, %vm1503
  %v1505 = vsel %vm1504, %v1497, %v1501
  %v1506 = vand.u32 2147483647, %v579
  %vm1507 = vcmp.eq.f32.partialorder %v1506, 8.507059e+37
  %v1508 = vand.u32 %v579, 2147483648
  %v1509 = vor.u32 1.1754944e-38, %v1508
  %v1510 = vsel %vm1507, %v1509, %v1505
  %v1511 = vmul.f32 1.0, %v1510
  %v1512 = vrcp.pop %v580
  %v1513 = vmul.f32 %v580, %v1512
  %v1514 = vsub.f32 1.0, %v1513
  %v1515 = vmul.f32 %v1512, %v1514
  %v1516 = vadd.f32 %v1512, %v1515
  %vm1517 = vweird.f32 %v580
  %vm1518 = vweird.f32 %v1512
  %vm1519 = vmor %vm1517, %vm1518
  %v1520 = vsel %vm1519, %v1512, %v1516
  %v1521 = vand.u32 2147483647, %v580
  %vm1522 = vcmp.eq.f32.partialorder %v1521, 8.507059e+37
  %v1523 = vand.u32 %v580, 2147483648
  %v1524 = vor.u32 1.1754944e-38, %v1523
  %v1525 = vsel %vm1522, %v1524, %v1520
  %v1526 = vmul.f32 1.0, %v1525
  %v1527 = vrcp.pop %v581
  %v1528 = vmul.f32 %v581, %v1527
  %v1529 = vsub.f32 1.0, %v1528
  %v1530 = vmul.f32 %v1527, %v1529
  %v1531 = vadd.f32 %v1527, %v1530
  %vm1532 = vweird.f32 %v581
  %vm1533 = vweird.f32 %v1527
  %vm1534 = vmor %vm1532, %vm1533
  %v1535 = vsel %vm1534, %v1527, %v1531
  %v1536 = vand.u32 2147483647, %v581
  %vm1537 = vcmp.eq.f32.partialorder %v1536, 8.507059e+37
  %v1538 = vand.u32 %v581, 2147483648
  %v1539 = vor.u32 1.1754944e-38, %v1538
  %v1540 = vsel %vm1537, %v1539, %v1535
  %v1541 = vmul.f32 1.0, %v1540
  %v1542 = vpack.c.bf16 %v626, %v596
  %v1543 = vpack.c.bf16 %v641, %v611
  %v1544 = vpack.c.bf16 %v686, %v656
  %v1545 = vpack.c.bf16 %v701, %v671
  %v1546 = vpack.c.bf16 %v746, %v716
  %v1547 = vpack.c.bf16 %v761, %v731
  %v1548 = vpack.c.bf16 %v806, %v776
  %v1549 = vpack.c.bf16 %v821, %v791
  %v1550 = vpack.c.bf16 %v866, %v836
  %v1551 = vpack.c.bf16 %v881, %v851
  %v1552 = vpack.c.bf16 %v926, %v896
  %v1553 = vpack.c.bf16 %v941, %v911
  %v1554 = vpack.c.bf16 %v986, %v956
  %v1555 = vpack.c.bf16 %v1001, %v971
  %v1556 = vpack.c.bf16 %v1046, %v1016
  %v1557 = vpack.c.bf16 %v1061, %v1031
  %v1558 = vpack.c.bf16 %v1106, %v1076
  %v1559 = vpack.c.bf16 %v1121, %v1091
  %v1560 = vpack.c.bf16 %v1166, %v1136
  %v1561 = vpack.c.bf16 %v1181, %v1151
  %v1562 = vpack.c.bf16 %v1226, %v1196
  %v1563 = vpack.c.bf16 %v1241, %v1211
  %v1564 = vpack.c.bf16 %v1286, %v1256
  %v1565 = vpack.c.bf16 %v1301, %v1271
  %v1566 = vpack.c.bf16 %v1346, %v1316
  %v1567 = vpack.c.bf16 %v1361, %v1331
  %v1568 = vpack.c.bf16 %v1406, %v1376
  %v1569 = vpack.c.bf16 %v1421, %v1391
  %v1570 = vpack.c.bf16 %v1466, %v1436
  %v1571 = vpack.c.bf16 %v1481, %v1451
  %v1572 = vpack.c.bf16 %v1526, %v1496
  %v1573 = vpack.c.bf16 %v1541, %v1511
  %v1574 = vld [vmem:[%s3] sm:$0xf]
  %v1575 = vld [vmem:[%s3 + $0x4] sm:$0xf]
  %v1576 = vld [vmem:[%s3 + $0x8] sm:$0xf]
  %v1577 = vld [vmem:[%s3 + $0xc] sm:$0xf]
  %v1578 = vld [vmem:[%s3 + $0x10] sm:$0xf]
  %v1579 = vld [vmem:[%s3 + $0x14] sm:$0xf]
  %v1580 = vld [vmem:[%s3 + $0x18] sm:$0xf]
  %v1581 = vld [vmem:[%s3 + $0x1c] sm:$0xf]
  %v1582 = vld [vmem:[%s3 + $0x20] sm:$0xf]
  %v1583 = vld [vmem:[%s3 + $0x24] sm:$0xf]
  %v1584 = vld [vmem:[%s3 + $0x28] sm:$0xf]
  %v1585 = vld [vmem:[%s3 + $0x2c] sm:$0xf]
  %v1586 = vld [vmem:[%s3 + $0x30] sm:$0xf]
  %v1587 = vld [vmem:[%s3 + $0x34] sm:$0xf]
  %v1588 = vld [vmem:[%s3 + $0x38] sm:$0xf]
  %v1589 = vld [vmem:[%s3 + $0x3c] sm:$0xf]
  %v1590 = vld [vmem:[%s3 + $0x40] sm:$0xf]
  %v1591 = vld [vmem:[%s3 + $0x44] sm:$0xf]
  %v1592 = vld [vmem:[%s3 + $0x48] sm:$0xf]
  %v1593 = vld [vmem:[%s3 + $0x4c] sm:$0xf]
  %v1594 = vld [vmem:[%s3 + $0x50] sm:$0xf]
  %v1595 = vld [vmem:[%s3 + $0x54] sm:$0xf]
  %v1596 = vld [vmem:[%s3 + $0x58] sm:$0xf]
  %v1597 = vld [vmem:[%s3 + $0x5c] sm:$0xf]
  %v1598 = vld [vmem:[%s3 + $0x60] sm:$0xf]
  %v1599 = vld [vmem:[%s3 + $0x64] sm:$0xf]
  %v1600 = vld [vmem:[%s3 + $0x68] sm:$0xf]
  %v1601 = vld [vmem:[%s3 + $0x6c] sm:$0xf]
  %v1602 = vld [vmem:[%s3 + $0x70] sm:$0xf]
  %v1603 = vld [vmem:[%s3 + $0x74] sm:$0xf]
  %v1604 = vld [vmem:[%s3 + $0x78] sm:$0xf]
  %v1605 = vld [vmem:[%s3 + $0x7c] sm:$0xf]
  %v1606 = vld [vmem:[%s4] sm:$0x1]
  %v1608 = vperm.slane %v1606, 0
  %v1642 = vunpack.c.l.b16 %v1574
  %v1643 = vunpack.c.l.b16 %v1575
  %v1644 = vunpack.c.l.b16 %v1576
  %v1645 = vunpack.c.l.b16 %v1577
  %v1646 = vunpack.c.l.b16 %v1578
  %v1647 = vunpack.c.l.b16 %v1579
  %v1648 = vunpack.c.l.b16 %v1580
  %v1649 = vunpack.c.l.b16 %v1581
  %v1650 = vunpack.c.l.b16 %v1582
  %v1651 = vunpack.c.l.b16 %v1583
  %v1652 = vunpack.c.l.b16 %v1584
  %v1653 = vunpack.c.l.b16 %v1585
  %v1654 = vunpack.c.l.b16 %v1586
  %v1655 = vunpack.c.l.b16 %v1587
  %v1656 = vunpack.c.l.b16 %v1588
  %v1657 = vunpack.c.l.b16 %v1589
  %v1658 = vunpack.c.l.b16 %v1590
  %v1659 = vunpack.c.l.b16 %v1591
  %v1660 = vunpack.c.l.b16 %v1592
  %v1661 = vunpack.c.l.b16 %v1593
  %v1662 = vunpack.c.l.b16 %v1594
  %v1663 = vunpack.c.l.b16 %v1595
  %v1664 = vunpack.c.l.b16 %v1596
  %v1665 = vunpack.c.l.b16 %v1597
  %v1666 = vunpack.c.l.b16 %v1598
  %v1667 = vunpack.c.l.b16 %v1599
  %v1668 = vunpack.c.l.b16 %v1600
  %v1669 = vunpack.c.l.b16 %v1601
  %v1670 = vunpack.c.l.b16 %v1602
  %v1671 = vunpack.c.l.b16 %v1603
  %v1672 = vunpack.c.l.b16 %v1604
  %v1673 = vunpack.c.l.b16 %v1605
  %v1674 = vpack.c.b16 %v1643, %v1642
  %v1675 = vpack.c.b16 %v1645, %v1644
  %v1676 = vpack.c.b16 %v1647, %v1646
  %v1677 = vpack.c.b16 %v1649, %v1648
  %v1678 = vpack.c.b16 %v1651, %v1650
  %v1679 = vpack.c.b16 %v1653, %v1652
  %v1680 = vpack.c.b16 %v1655, %v1654
  %v1681 = vpack.c.b16 %v1657, %v1656
  %v1682 = vpack.c.b16 %v1659, %v1658
  %v1683 = vpack.c.b16 %v1661, %v1660
  %v1684 = vpack.c.b16 %v1663, %v1662
  %v1685 = vpack.c.b16 %v1665, %v1664
  %v1686 = vpack.c.b16 %v1667, %v1666
  %v1687 = vpack.c.b16 %v1669, %v1668
  %v1688 = vpack.c.b16 %v1671, %v1670
  %v1689 = vpack.c.b16 %v1673, %v1672
  %1706 = vmatpush.bf16.msra.mxu0 %v1681
  %1707 = vmatpush.bf16.msra.mxu0 %v1680
  %1708 = vmatpush.bf16.msra.mxu0 %v1679
  %1709 = vmatpush.bf16.msra.mxu0 %v1678
  %1710 = vmatpush.bf16.msra.mxu0 %v1677
  %1711 = vmatpush.bf16.msra.mxu0 %v1676
  %1712 = vmatpush.bf16.msra.mxu0 %v1675
  %1713 = vmatpush.bf16.msra.mxu0 %v1674
  %1714 = vmatmul.bf16.gmra.mxu0 %v1542
  %v1715 = vpop.f32.mrf.mxu0
  %v1716 = vadd.f32 %v1608, %v1715
  %v1717 = vpop.f32.mrf.mxu0
  %v1718 = vadd.f32 %v1608, %v1717
  %1719 = vmatmul.bf16.gmra.mxu0 %v1544
  %v1720 = vpop.f32.mrf.mxu0
  %v1721 = vadd.f32 %v1608, %v1720
  %v1722 = vpop.f32.mrf.mxu0
  %v1723 = vadd.f32 %v1608, %v1722
  %1724 = vmatmul.bf16.gmra.mxu0 %v1546
  %v1725 = vpop.f32.mrf.mxu0
  %v1726 = vadd.f32 %v1608, %v1725
  %v1727 = vpop.f32.mrf.mxu0
  %v1728 = vadd.f32 %v1608, %v1727
  %1729 = vmatmul.bf16.gmra.mxu0 %v1548
  %v1730 = vpop.f32.mrf.mxu0
  %v1731 = vadd.f32 %v1608, %v1730
  %v1732 = vpop.f32.mrf.mxu0
  %v1733 = vadd.f32 %v1608, %v1732
  %1734 = vmatmul.bf16.gmra.mxu0 %v1550
  %v1735 = vpop.f32.mrf.mxu0
  %v1736 = vadd.f32 %v1608, %v1735
  %v1737 = vpop.f32.mrf.mxu0
  %v1738 = vadd.f32 %v1608, %v1737
  %1739 = vmatmul.bf16.gmra.mxu0 %v1552
  %v1740 = vpop.f32.mrf.mxu0
  %v1741 = vadd.f32 %v1608, %v1740
  %v1742 = vpop.f32.mrf.mxu0
  %v1743 = vadd.f32 %v1608, %v1742
  %1744 = vmatmul.bf16.gmra.mxu0 %v1554
  %v1745 = vpop.f32.mrf.mxu0
  %v1746 = vadd.f32 %v1608, %v1745
  %v1747 = vpop.f32.mrf.mxu0
  %v1748 = vadd.f32 %v1608, %v1747
  %1749 = vmatmul.bf16.gmra.mxu0 %v1556
  %v1750 = vpop.f32.mrf.mxu0
  %v1751 = vadd.f32 %v1608, %v1750
  %v1752 = vpop.f32.mrf.mxu0
  %v1753 = vadd.f32 %v1608, %v1752
  %1754 = vmatmul.bf16.gmra.mxu0 %v1558
  %v1755 = vpop.f32.mrf.mxu0
  %v1756 = vadd.f32 %v1608, %v1755
  %v1757 = vpop.f32.mrf.mxu0
  %v1758 = vadd.f32 %v1608, %v1757
  %1759 = vmatmul.bf16.gmra.mxu0 %v1560
  %v1760 = vpop.f32.mrf.mxu0
  %v1761 = vadd.f32 %v1608, %v1760
  %v1762 = vpop.f32.mrf.mxu0
  %v1763 = vadd.f32 %v1608, %v1762
  %1764 = vmatmul.bf16.gmra.mxu0 %v1562
  %v1765 = vpop.f32.mrf.mxu0
  %v1766 = vadd.f32 %v1608, %v1765
  %v1767 = vpop.f32.mrf.mxu0
  %v1768 = vadd.f32 %v1608, %v1767
  %1769 = vmatmul.bf16.gmra.mxu0 %v1564
  %v1770 = vpop.f32.mrf.mxu0
  %v1771 = vadd.f32 %v1608, %v1770
  %v1772 = vpop.f32.mrf.mxu0
  %v1773 = vadd.f32 %v1608, %v1772
  %1774 = vmatmul.bf16.gmra.mxu0 %v1566
  %v1775 = vpop.f32.mrf.mxu0
  %v1776 = vadd.f32 %v1608, %v1775
  %v1777 = vpop.f32.mrf.mxu0
  %v1778 = vadd.f32 %v1608, %v1777
  %1779 = vmatmul.bf16.gmra.mxu0 %v1568
  %v1780 = vpop.f32.mrf.mxu0
  %v1781 = vadd.f32 %v1608, %v1780
  %v1782 = vpop.f32.mrf.mxu0
  %v1783 = vadd.f32 %v1608, %v1782
  %1784 = vmatmul.bf16.gmra.mxu0 %v1570
  %v1785 = vpop.f32.mrf.mxu0
  %v1786 = vadd.f32 %v1608, %v1785
  %v1787 = vpop.f32.mrf.mxu0
  %v1788 = vadd.f32 %v1608, %v1787
  %1789 = vmatmul.bf16.gmra.mxu0 %v1572
  %v1790 = vpop.f32.mrf.mxu0
  %v1791 = vadd.f32 %v1608, %v1790
  %v1792 = vpop.f32.mrf.mxu0
  %v1793 = vadd.f32 %v1608, %v1792
  %1794 = vdwg.mxu0
  %1795 = vmatpush.bf16.msra.mxu0 %v1689
  %1796 = vmatpush.bf16.msra.mxu0 %v1688
  %1797 = vmatpush.bf16.msra.mxu0 %v1687
  %1798 = vmatpush.bf16.msra.mxu0 %v1686
  %1799 = vmatpush.bf16.msra.mxu0 %v1685
  %1800 = vmatpush.bf16.msra.mxu0 %v1684
  %1801 = vmatpush.bf16.msra.mxu0 %v1683
  %1802 = vmatpush.bf16.msra.mxu0 %v1682
  %1803 = vmatmul.bf16.gmra.mxu0 %v1543
  %v1804 = vpop.f32.mrf.mxu0
  %v1805 = vadd.f32 %v1716, %v1804
  %v1806 = vpop.f32.mrf.mxu0
  %v1807 = vadd.f32 %v1718, %v1806
  %1808 = vmatmul.bf16.gmra.mxu0 %v1545
  %v1809 = vpop.f32.mrf.mxu0
  %v1810 = vadd.f32 %v1721, %v1809
  %v1811 = vpop.f32.mrf.mxu0
  %v1812 = vadd.f32 %v1723, %v1811
  %1813 = vmatmul.bf16.gmra.mxu0 %v1547
  %v1814 = vpop.f32.mrf.mxu0
  %v1815 = vadd.f32 %v1726, %v1814
  %v1816 = vpop.f32.mrf.mxu0
  %v1817 = vadd.f32 %v1728, %v1816
  %1818 = vmatmul.bf16.gmra.mxu0 %v1549
  %v1819 = vpop.f32.mrf.mxu0
  %v1820 = vadd.f32 %v1731, %v1819
  %v1821 = vpop.f32.mrf.mxu0
  %v1822 = vadd.f32 %v1733, %v1821
  %1823 = vmatmul.bf16.gmra.mxu0 %v1551
  %v1824 = vpop.f32.mrf.mxu0
  %v1825 = vadd.f32 %v1736, %v1824
  %v1826 = vpop.f32.mrf.mxu0
  %v1827 = vadd.f32 %v1738, %v1826
  %1828 = vmatmul.bf16.gmra.mxu0 %v1553
  %v1829 = vpop.f32.mrf.mxu0
  %v1830 = vadd.f32 %v1741, %v1829
  %v1831 = vpop.f32.mrf.mxu0
  %v1832 = vadd.f32 %v1743, %v1831
  %1833 = vmatmul.bf16.gmra.mxu0 %v1555
  %v1834 = vpop.f32.mrf.mxu0
  %v1835 = vadd.f32 %v1746, %v1834
  %v1836 = vpop.f32.mrf.mxu0
  %v1837 = vadd.f32 %v1748, %v1836
  %1838 = vmatmul.bf16.gmra.mxu0 %v1557
  %v1839 = vpop.f32.mrf.mxu0
  %v1840 = vadd.f32 %v1751, %v1839
  %v1841 = vpop.f32.mrf.mxu0
  %v1842 = vadd.f32 %v1753, %v1841
  %1843 = vmatmul.bf16.gmra.mxu0 %v1559
  %v1844 = vpop.f32.mrf.mxu0
  %v1845 = vadd.f32 %v1756, %v1844
  %v1846 = vpop.f32.mrf.mxu0
  %v1847 = vadd.f32 %v1758, %v1846
  %1848 = vmatmul.bf16.gmra.mxu0 %v1561
  %v1849 = vpop.f32.mrf.mxu0
  %v1850 = vadd.f32 %v1761, %v1849
  %v1851 = vpop.f32.mrf.mxu0
  %v1852 = vadd.f32 %v1763, %v1851
  %1853 = vmatmul.bf16.gmra.mxu0 %v1563
  %v1854 = vpop.f32.mrf.mxu0
  %v1855 = vadd.f32 %v1766, %v1854
  %v1856 = vpop.f32.mrf.mxu0
  %v1857 = vadd.f32 %v1768, %v1856
  %1858 = vmatmul.bf16.gmra.mxu0 %v1565
  %v1859 = vpop.f32.mrf.mxu0
  %v1860 = vadd.f32 %v1771, %v1859
  %v1861 = vpop.f32.mrf.mxu0
  %v1862 = vadd.f32 %v1773, %v1861
  %1863 = vmatmul.bf16.gmra.mxu0 %v1567
  %v1864 = vpop.f32.mrf.mxu0
  %v1865 = vadd.f32 %v1776, %v1864
  %v1866 = vpop.f32.mrf.mxu0
  %v1867 = vadd.f32 %v1778, %v1866
  %1868 = vmatmul.bf16.gmra.mxu0 %v1569
  %v1869 = vpop.f32.mrf.mxu0
  %v1870 = vadd.f32 %v1781, %v1869
  %v1871 = vpop.f32.mrf.mxu0
  %v1872 = vadd.f32 %v1783, %v1871
  %1873 = vmatmul.bf16.gmra.mxu0 %v1571
  %v1874 = vpop.f32.mrf.mxu0
  %v1875 = vadd.f32 %v1786, %v1874
  %v1876 = vpop.f32.mrf.mxu0
  %v1877 = vadd.f32 %v1788, %v1876
  %1878 = vmatmul.bf16.gmra.mxu0 %v1573
  %v1879 = vpop.f32.mrf.mxu0
  %v1880 = vadd.f32 %v1791, %v1879
  %v1881 = vpop.f32.mrf.mxu0
  %v1882 = vadd.f32 %v1793, %v1881
  %1883 = vdwg.mxu0
  %vm1884 = vcmask 64512
  %1885 = vst.msk [vmem:[%s5] sm:$0xff] %vm1884, %v1805
  %1886 = vst.msk [vmem:[%s5 + $0x8] sm:$0xff] %vm1884, %v1807
  %1887 = vst.msk [vmem:[%s5 + $0x10] sm:$0xff] %vm1884, %v1810
  %1888 = vst.msk [vmem:[%s5 + $0x18] sm:$0xff] %vm1884, %v1812
  %1889 = vst.msk [vmem:[%s5 + $0x20] sm:$0xff] %vm1884, %v1815
  %1890 = vst.msk [vmem:[%s5 + $0x28] sm:$0xff] %vm1884, %v1817
  %1891 = vst.msk [vmem:[%s5 + $0x30] sm:$0xff] %vm1884, %v1820
  %1892 = vst.msk [vmem:[%s5 + $0x38] sm:$0xff] %vm1884, %v1822
  %1893 = vst.msk [vmem:[%s5 + $0x40] sm:$0xff] %vm1884, %v1825
  %1894 = vst.msk [vmem:[%s5 + $0x48] sm:$0xff] %vm1884, %v1827
  %1895 = vst.msk [vmem:[%s5 + $0x50] sm:$0xff] %vm1884, %v1830
  %1896 = vst.msk [vmem:[%s5 + $0x58] sm:$0xff] %vm1884, %v1832
  %1897 = vst.msk [vmem:[%s5 + $0x60] sm:$0xff] %vm1884, %v1835
  %1898 = vst.msk [vmem:[%s5 + $0x68] sm:$0xff] %vm1884, %v1837
  %1899 = vst.msk [vmem:[%s5 + $0x70] sm:$0xff] %vm1884, %v1840
  %1900 = vst.msk [vmem:[%s5 + $0x78] sm:$0xff] %vm1884, %v1842
  %1901 = vst.msk [vmem:[%s5 + $0x80] sm:$0xff] %vm1884, %v1845
  %1902 = vst.msk [vmem:[%s5 + $0x88] sm:$0xff] %vm1884, %v1847
  %1903 = vst.msk [vmem:[%s5 + $0x90] sm:$0xff] %vm1884, %v1850
  %1904 = vst.msk [vmem:[%s5 + $0x98] sm:$0xff] %vm1884, %v1852
  %1905 = vst.msk [vmem:[%s5 + $0xa0] sm:$0xff] %vm1884, %v1855
  %1906 = vst.msk [vmem:[%s5 + $0xa8] sm:$0xff] %vm1884, %v1857
  %1907 = vst.msk [vmem:[%s5 + $0xb0] sm:$0xff] %vm1884, %v1860
  %1908 = vst.msk [vmem:[%s5 + $0xb8] sm:$0xff] %vm1884, %v1862
  %1909 = vst.msk [vmem:[%s5 + $0xc0] sm:$0xff] %vm1884, %v1865
  %1910 = vst.msk [vmem:[%s5 + $0xc8] sm:$0xff] %vm1884, %v1867
  %1911 = vst.msk [vmem:[%s5 + $0xd0] sm:$0xff] %vm1884, %v1870
  %1912 = vst.msk [vmem:[%s5 + $0xd8] sm:$0xff] %vm1884, %v1872
  %1913 = vst.msk [vmem:[%s5 + $0xe0] sm:$0xff] %vm1884, %v1875
  %1914 = vst.msk [vmem:[%s5 + $0xe8] sm:$0xff] %vm1884, %v1877
  %1915 = vst.msk [vmem:[%s5 + $0xf0] sm:$0xff] %vm1884, %v1880
  %1916 = vst.msk [vmem:[%s5 + $0xf8] sm:$0xff] %vm1884, %v1882
  // Predicated region
  $region22: #{net_forward.1} parent=0 // pred_check
    _
  $region23: #{net_forward.1} parent=0 // pred_check_branch
    %1918 = sbr.rel (0) target = $region25
  $region24: #{net_forward.1} parent=0 // pred_region
    _
  $region25: #{net_forward.1} parent=0 // pred_fallthru
    _
  // Predicated region
  $region26: #{net_forward.1} parent=0 // pred_check
    _
  $region27: #{net_forward.1} parent=0 // pred_check_branch
    %1920 = sbr.rel (0) target = $region29
  $region28: #{net_forward.1} parent=0 // pred_region
    _
  $region29: #{net_forward.1} parent=0 // pred_fallthru
    _

</llo_original>
